<compile_context>
chip_gen: v5e
topology: v5e:2x2
jax: 0.10.0
libtpu: 0.0.40
codegen_flags: <defaults>
</compile_context>

<pallas_src>
import functools

import numpy as np
import jax
import jax.numpy as jnp
from jax import lax
from jax.experimental import pallas as pl
from jax.experimental.pallas import tpu as pltpu

C = 128          # channel count fixed by the module (rv has 128 channels)
CLAMP_HI = 21    # hard-coded clamp in the PyTorch module
POOL = 2         # AdaptiveMaxPool3d(output_size=2)
NEG = float("-inf")


def _crop_pool_kernel(bounds_ref, fm_ref, out_ref, acc_ref, *, dims, group, num_groups):
    D, H, W = dims
    i = pl.program_id(0)
    g = pl.program_id(1)

    # Small per-axis iotas, hoisted out of the proposal loop.
    iota_h = lax.broadcasted_iota(jnp.int32, (1, H, 1, C), 1)
    iota_w = lax.broadcasted_iota(jnp.int32, (1, 1, W, C), 2)

    def bin_offsets(iota, lo, b0e, b1s, hi):
        # 0 / -inf additive masks for the two adaptive bins [lo,b0e) and [b1s,hi).
        o0 = jnp.where((iota >= lo) & (iota < b0e), 0.0, NEG)
        o1 = jnp.where((iota >= b1s) & (iota < hi), 0.0, NEG)
        return o0, o1

    def proposal_body(p, carry):
        # 12 precomputed int32 bounds per proposal: (lo, bin0_end, bin1_start, hi) x (D,H,W).
        base = ((i * num_groups + g) * group + p) * 12
        b = [bounds_ref[base + t] for t in range(12)]
        d_lo, d_b0e, d_b1s, d_hi = b[0], b[1], b[2], b[3]
        h_lo, h_b0e, h_b1s, h_hi = b[4], b[5], b[6], b[7]
        w_lo, w_b0e, w_b1s, w_hi = b[8], b[9], b[10], b[11]

        # ---- D axis: stream only the in-crop depth slabs (dynamic trip count).
        # Each adaptive D-bin has >= 1 slab (crop size >= 1), so init from the
        # first slab and max-accumulate the rest -- no -inf fill needed.
        acc_ref[0] = fm_ref[0, d_lo]                 # (H*W, C), channels on lanes

        def d_body0(d, c):
            acc_ref[0] = jnp.maximum(acc_ref[0], fm_ref[0, d])
            return c
        lax.fori_loop(d_lo + 1, d_b0e, d_body0, 0)

        acc_ref[1] = fm_ref[0, d_b1s]

        def d_body1(d, c):
            acc_ref[1] = jnp.maximum(acc_ref[1], fm_ref[0, d])
            return c
        lax.fori_loop(d_b1s + 1, d_hi, d_body1, 0)

        v = acc_ref[...].reshape(POOL, H, W, C)      # pure re-view (576 = 72 sublane tiles)

        # ---- H axis (major): add 0/-inf per-bin offset, VPU max over H.
        h0, h1 = bin_offsets(iota_h, h_lo, h_b0e, h_b1s, h_hi)
        v = jnp.stack([jnp.max(v + h0, axis=1),
                       jnp.max(v + h1, axis=1)], axis=1)      # (2, 2, W, C)

        # ---- W axis (sublane): tiny tail, cross-sublane max.
        w0, w1 = bin_offsets(iota_w, w_lo, w_b0e, w_b1s, w_hi)
        v = jnp.stack([jnp.max(v + w0, axis=2),
                       jnp.max(v + w1, axis=2)], axis=2)      # (2, 2, 2, C)

        out_ref[0, p] = v.reshape(POOL * POOL * POOL, C)
        return carry

    lax.fori_loop(0, group, proposal_body, 0)


def crop_proposals(fm, corners, scale, *, group=8):
    """fm: (B, 128, D, H, W), corners: (B, N, 2, 3), scale: python scalar.
    Returns (B, N, 128, 2, 2, 2) float32 (same as the PyTorch module)."""
    B, Cc, D, H, W = fm.shape
    assert Cc == C
    N = corners.shape[1]

    # Rebalance group size to minimize dummy-proposal padding.
    group = max(1, min(group, N))
    num_groups = -(-N // group)
    group = -(-N // num_groups)
    n_pad = num_groups * group

    # TODO(synk): this NCDHW -> channels-last transpose is a full HBM round trip of
    # the feature map; emit fm channels-last upstream to skip it.
    fm_t = jnp.transpose(fm.astype(jnp.float32), (0, 2, 3, 4, 1)).reshape(B, D, H * W, C)

    # Vectorized per-proposal integer bounds (PyTorch int()/clamp/min-size-2 +
    # python slice truncation + AdaptiveMaxPool3d bin boundaries).
    q = (corners.astype(jnp.float32) / jnp.float32(scale)).astype(jnp.int32)  # trunc toward 0
    p1 = jnp.clip(q[:, :, 0, :], 0, CLAMP_HI)                                 # (B, N, 3)
    q2 = q[:, :, 1, :]
    p2 = jnp.where(q2 - p1 >= 2, q2, p1 + 2)
    hi = jnp.minimum(p2, jnp.array([D, H, W], jnp.int32))                     # slice truncation
    lo = p1
    size = hi - lo
    b0e = lo + (size + 1) // 2                      # end of adaptive bin 0   (ceil(size/2))
    b1s = lo + size // 2                            # start of adaptive bin 1 (floor(size/2))
    bounds = jnp.stack([lo, b0e, b1s, hi], axis=-1).reshape(B, N, 12)
    if n_pad != N:
        dummy = jnp.tile(jnp.array([[[0, 1, 1, 2] * 3]], jnp.int32), (B, n_pad - N, 1))
        bounds = jnp.concatenate([bounds, dummy], axis=1)   # valid dummies, discarded later
    bounds = bounds.reshape(-1)

    slab_bytes = D * H * W * C * 4
    # double-buffered fm slab + accumulators/small temps; safe on v7x (64 MiB VMEM).
    vmem_limit = min(2 * slab_bytes + (16 << 20), 60 << 20)

    kernel = functools.partial(_crop_pool_kernel, dims=(D, H, W),
                               group=group, num_groups=num_groups)
    out = pl.pallas_call(
        kernel,
        out_shape=jax.ShapeDtypeStruct((B, n_pad, POOL ** 3, C), jnp.float32),
        grid=(B, num_groups),
        in_specs=[
            pl.BlockSpec(memory_space=pltpu.MemorySpace.SMEM),            # bounds (int32 scalars)
            pl.BlockSpec((1, D, H * W, C), lambda i, g: (i, 0, 0, 0)),    # fm slab for batch i
        ],
        out_specs=pl.BlockSpec((1, group, POOL ** 3, C), lambda i, g: (i, g, 0, 0)),
        scratch_shapes=[pltpu.VMEM((POOL, H * W, C), jnp.float32)],
        compiler_params=pltpu.CompilerParams(
            dimension_semantics=("parallel", "parallel"),
            vmem_limit_bytes=int(vmem_limit),
        ),
    )(bounds, fm_t)

    out = out[:, :N].reshape(B, N, POOL, POOL, POOL, C)
    return jnp.transpose(out, (0, 1, 5, 2, 3, 4))


# ---------------- pure numpy reference (PyTorch semantics) ----------------
def _adaptive_max_pool3d_np(x, out_size):
    Cc, d, h, w = x.shape
    r = np.zeros((Cc, out_size, out_size, out_size), np.float32)

    def bounds(k, s):
        return (k * s) // out_size, -((-(k + 1) * s) // out_size)

    for a in range(out_size):
        a0, a1 = bounds(a, d)
        for b in range(out_size):
            b0, b1 = bounds(b, h)
            for c in range(out_size):
                c0, c1 = bounds(c, w)
                r[:, a, b, c] = x[:, a0:a1, b0:b1, c0:c1].max(axis=(1, 2, 3))
    return r


def crop_proposals_ref(fm, corners, scale):
    B, Cc, D, H, W = fm.shape
    N = corners.shape[1]
    rv = np.zeros((B, N, Cc, 2, 2, 2), np.float32)
    for i in range(B):
        for j in range(N):
            p1 = [int(np.float32(corners[i, j, 0, x]) / np.float32(scale)) for x in range(3)]
            p1 = [min(max(v, 0), CLAMP_HI) for v in p1]
            p2 = [int(np.float32(corners[i, j, 1, x]) / np.float32(scale)) for x in range(3)]
            p2 = [p2[x] if p2[x] - p1[x] >= 2 else p1[x] + 2 for x in range(3)]
            crop = fm[i, :, p1[0]:p2[0], p1[1]:p2[1], p1[2]:p2[2]]
            rv[i, j] = _adaptive_max_pool3d_np(crop, POOL)
    return rv


if __name__ == "__main__":
    # channels=128 and spatial>=22 are required by the module (hard-coded 128 and 0..21 clamp).
    B, N, D, H, W = 2, 10, 24, 24, 24
    scale = 2.0

    key = jax.random.PRNGKey(0)
    kfm, kc1, kc2 = jax.random.split(key, 3)
    fm = jax.random.normal(kfm, (B, C, D, H, W), jnp.float32)
    c1 = jax.random.uniform(kc1, (B, N, 1, 3), jnp.float32, minval=-4.0, maxval=44.0)
    ext = jax.random.uniform(kc2, (B, N, 1, 3), jnp.float32, minval=0.0, maxval=24.0)
    corners = jnp.concatenate([c1, c1 + ext], axis=2)

    out = jax.block_until_ready(crop_proposals(fm, corners, scale))
    assert out.shape == (B, N, C, 2, 2, 2) and out.dtype == jnp.float32

    ref = crop_proposals_ref(np.asarray(fm), np.asarray(corners), float(scale))
    np.testing.assert_allclose(np.asarray(out), ref, rtol=0, atol=1e-6)
    print("KERNEL_OK")
</pallas_src>

<mosaic_0001>
module attributes {stable_mosaic.version = 11 : i64} {
  func.func @_crop_pool_kernel(%arg0: i32, %arg1: i32, %arg2: memref<240xi32, #tpu.memory_space<smem>>, %arg3: memref<1x24x576x128xf32, #tpu.memory_space<vmem>>, %arg4: memref<1x5x8x128xf32, #tpu.memory_space<vmem>>, %arg5: memref<2x576x128xf32, #tpu.memory_space<vmem>>) attributes {dimension_semantics = [#tpu.dimension_semantics<parallel>, #tpu.dimension_semantics<parallel>], iteration_bounds = array<i64: 2, 2>, scalar_prefetch = 0 : i64, scratch_operands = 1 : i64, tpu.core_type = #tpu.core_type<tc>, window_params = [{transform_indices = @transform_0, window_bounds = array<i64: 240>}, {transform_indices = @transform_1, window_bounds = array<i64: 1, 24, 576, 128>}, {transform_indices = @transform_2, window_bounds = array<i64: 1, 5, 8, 128>}]} {
    %0 = tpu.iota {dimensions = array<i32: 1>} : vector<1x24x1x128xi32>
    %1 = tpu.iota {dimensions = array<i32: 2>} : vector<1x1x24x128xi32>
    %c0_i32 = arith.constant 0 : i32
    %c5_i32 = arith.constant 5 : i32
    %2 = arith.addi %c0_i32, %c5_i32 : i32
    %c1_i32 = arith.constant 1 : i32
    scf.for %arg6 = %c0_i32 to %2 step %c1_i32  : i32 {
      %c2_i32 = arith.constant 2 : i32
      %3 = arith.muli %arg0, %c2_i32 : i32
      %4 = arith.addi %3, %arg1 : i32
      %c5_i32_1 = arith.constant 5 : i32
      %5 = arith.muli %4, %c5_i32_1 : i32
      %6 = arith.addi %5, %arg6 : i32
      %c12_i32 = arith.constant 12 : i32
      %7 = arith.muli %6, %c12_i32 : i32
      %c0_i32_2 = arith.constant 0 : i32
      %8 = arith.addi %7, %c0_i32_2 : i32
      %9 = arith.index_cast %8 : i32 to index
      %10 = memref.load %arg2[%9] : memref<240xi32, #tpu.memory_space<smem>>
      %c1_i32_3 = arith.constant 1 : i32
      %11 = arith.addi %7, %c1_i32_3 : i32
      %12 = arith.index_cast %11 : i32 to index
      %13 = memref.load %arg2[%12] : memref<240xi32, #tpu.memory_space<smem>>
      %c2_i32_4 = arith.constant 2 : i32
      %14 = arith.addi %7, %c2_i32_4 : i32
      %15 = arith.index_cast %14 : i32 to index
      %16 = memref.load %arg2[%15] : memref<240xi32, #tpu.memory_space<smem>>
      %c3_i32 = arith.constant 3 : i32
      %17 = arith.addi %7, %c3_i32 : i32
      %18 = arith.index_cast %17 : i32 to index
      %19 = memref.load %arg2[%18] : memref<240xi32, #tpu.memory_space<smem>>
      %c4_i32 = arith.constant 4 : i32
      %20 = arith.addi %7, %c4_i32 : i32
      %21 = arith.index_cast %20 : i32 to index
      %22 = memref.load %arg2[%21] : memref<240xi32, #tpu.memory_space<smem>>
      %c5_i32_5 = arith.constant 5 : i32
      %23 = arith.addi %7, %c5_i32_5 : i32
      %24 = arith.index_cast %23 : i32 to index
      %25 = memref.load %arg2[%24] : memref<240xi32, #tpu.memory_space<smem>>
      %c6_i32 = arith.constant 6 : i32
      %26 = arith.addi %7, %c6_i32 : i32
      %27 = arith.index_cast %26 : i32 to index
      %28 = memref.load %arg2[%27] : memref<240xi32, #tpu.memory_space<smem>>
      %c7_i32 = arith.constant 7 : i32
      %29 = arith.addi %7, %c7_i32 : i32
      %30 = arith.index_cast %29 : i32 to index
      %31 = memref.load %arg2[%30] : memref<240xi32, #tpu.memory_space<smem>>
      %c8_i32 = arith.constant 8 : i32
      %32 = arith.addi %7, %c8_i32 : i32
      %33 = arith.index_cast %32 : i32 to index
      %34 = memref.load %arg2[%33] : memref<240xi32, #tpu.memory_space<smem>>
      %c9_i32 = arith.constant 9 : i32
      %35 = arith.addi %7, %c9_i32 : i32
      %36 = arith.index_cast %35 : i32 to index
      %37 = memref.load %arg2[%36] : memref<240xi32, #tpu.memory_space<smem>>
      %c10_i32 = arith.constant 10 : i32
      %38 = arith.addi %7, %c10_i32 : i32
      %39 = arith.index_cast %38 : i32 to index
      %40 = memref.load %arg2[%39] : memref<240xi32, #tpu.memory_space<smem>>
      %c11_i32 = arith.constant 11 : i32
      %41 = arith.addi %7, %c11_i32 : i32
      %42 = arith.index_cast %41 : i32 to index
      %43 = memref.load %arg2[%42] : memref<240xi32, #tpu.memory_space<smem>>
      %c0 = arith.constant 0 : index
      %44 = arith.index_cast %10 : i32 to index
      %c0_6 = arith.constant 0 : index
      %c0_7 = arith.constant 0 : index
      %45 = vector.load %arg3[%c0, %44, %c0_6, %c0_7] : memref<1x24x576x128xf32, #tpu.memory_space<vmem>>, vector<1x1x576x128xf32>
      %46 = vector.shape_cast %45 : vector<1x1x576x128xf32> to vector<576x128xf32>
      %c0_8 = arith.constant 0 : index
      %c0_9 = arith.constant 0 : index
      %c0_10 = arith.constant 0 : index
      %47 = vector.load %arg5[%c0_8, %c0_9, %c0_10] : memref<2x576x128xf32, #tpu.memory_space<vmem>>, vector<1x576x128xf32>
      %48 = vector.shape_cast %47 : vector<1x576x128xf32> to vector<576x128xf32>
      %49 = vector.shape_cast %46 : vector<576x128xf32> to vector<1x576x128xf32>
      tpu.vector_store %arg5[%c0_8, %c0_9, %c0_10], %49 {strides = array<i32>} : memref<2x576x128xf32, #tpu.memory_space<vmem>>, vector<1x576x128xf32>,
      %c1_i32_11 = arith.constant 1 : i32
      %50 = arith.addi %10, %c1_i32_11 : i32
      %c0_i32_12 = arith.constant 0 : i32
      %51 = arith.subi %13, %50 : i32
      %52 = arith.addi %50, %51 : i32
      %c1_i32_13 = arith.constant 1 : i32
      scf.for %arg7 = %50 to %52 step %c1_i32_13  : i32 {
        %c0_39 = arith.constant 0 : index
        %c0_40 = arith.constant 0 : index
        %c0_41 = arith.constant 0 : index
        %119 = vector.load %arg5[%c0_39, %c0_40, %c0_41] : memref<2x576x128xf32, #tpu.memory_space<vmem>>, vector<1x576x128xf32>
        %120 = vector.shape_cast %119 : vector<1x576x128xf32> to vector<576x128xf32>
        %c0_42 = arith.constant 0 : index
        %121 = arith.index_cast %arg7 : i32 to index
        %c0_43 = arith.constant 0 : index
        %c0_44 = arith.constant 0 : index
        %122 = vector.load %arg3[%c0_42, %121, %c0_43, %c0_44] : memref<1x24x576x128xf32, #tpu.memory_space<vmem>>, vector<1x1x576x128xf32>
        %123 = vector.shape_cast %122 : vector<1x1x576x128xf32> to vector<576x128xf32>
        %124 = arith.maximumf %120, %123 : vector<576x128xf32>
        %c0_45 = arith.constant 0 : index
        %c0_46 = arith.constant 0 : index
        %c0_47 = arith.constant 0 : index
        %125 = vector.load %arg5[%c0_45, %c0_46, %c0_47] : memref<2x576x128xf32, #tpu.memory_space<vmem>>, vector<1x576x128xf32>
        %126 = vector.shape_cast %125 : vector<1x576x128xf32> to vector<576x128xf32>
        %127 = vector.shape_cast %124 : vector<576x128xf32> to vector<1x576x128xf32>
        tpu.vector_store %arg5[%c0_45, %c0_46, %c0_47], %127 {strides = array<i32>} : memref<2x576x128xf32, #tpu.memory_space<vmem>>, vector<1x576x128xf32>,
      }
      %c0_14 = arith.constant 0 : index
      %53 = arith.index_cast %16 : i32 to index
      %c0_15 = arith.constant 0 : index
      %c0_16 = arith.constant 0 : index
      %54 = vector.load %arg3[%c0_14, %53, %c0_15, %c0_16] : memref<1x24x576x128xf32, #tpu.memory_space<vmem>>, vector<1x1x576x128xf32>
      %55 = vector.shape_cast %54 : vector<1x1x576x128xf32> to vector<576x128xf32>
      %c1 = arith.constant 1 : index
      %c0_17 = arith.constant 0 : index
      %c0_18 = arith.constant 0 : index
      %56 = vector.load %arg5[%c1, %c0_17, %c0_18] : memref<2x576x128xf32, #tpu.memory_space<vmem>>, vector<1x576x128xf32>
      %57 = vector.shape_cast %56 : vector<1x576x128xf32> to vector<576x128xf32>
      %58 = vector.shape_cast %55 : vector<576x128xf32> to vector<1x576x128xf32>
      tpu.vector_store %arg5[%c1, %c0_17, %c0_18], %58 {strides = array<i32>} : memref<2x576x128xf32, #tpu.memory_space<vmem>>, vector<1x576x128xf32>,
      %c1_i32_19 = arith.constant 1 : i32
      %59 = arith.addi %16, %c1_i32_19 : i32
      %c0_i32_20 = arith.constant 0 : i32
      %60 = arith.subi %19, %59 : i32
      %61 = arith.addi %59, %60 : i32
      %c1_i32_21 = arith.constant 1 : i32
      scf.for %arg7 = %59 to %61 step %c1_i32_21  : i32 {
        %c1_39 = arith.constant 1 : index
        %c0_40 = arith.constant 0 : index
        %c0_41 = arith.constant 0 : index
        %119 = vector.load %arg5[%c1_39, %c0_40, %c0_41] : memref<2x576x128xf32, #tpu.memory_space<vmem>>, vector<1x576x128xf32>
        %120 = vector.shape_cast %119 : vector<1x576x128xf32> to vector<576x128xf32>
        %c0_42 = arith.constant 0 : index
        %121 = arith.index_cast %arg7 : i32 to index
        %c0_43 = arith.constant 0 : index
        %c0_44 = arith.constant 0 : index
        %122 = vector.load %arg3[%c0_42, %121, %c0_43, %c0_44] : memref<1x24x576x128xf32, #tpu.memory_space<vmem>>, vector<1x1x576x128xf32>
        %123 = vector.shape_cast %122 : vector<1x1x576x128xf32> to vector<576x128xf32>
        %124 = arith.maximumf %120, %123 : vector<576x128xf32>
        %c1_45 = arith.constant 1 : index
        %c0_46 = arith.constant 0 : index
        %c0_47 = arith.constant 0 : index
        %125 = vector.load %arg5[%c1_45, %c0_46, %c0_47] : memref<2x576x128xf32, #tpu.memory_space<vmem>>, vector<1x576x128xf32>
        %126 = vector.shape_cast %125 : vector<1x576x128xf32> to vector<576x128xf32>
        %127 = vector.shape_cast %124 : vector<576x128xf32> to vector<1x576x128xf32>
        tpu.vector_store %arg5[%c1_45, %c0_46, %c0_47], %127 {strides = array<i32>} : memref<2x576x128xf32, #tpu.memory_space<vmem>>, vector<1x576x128xf32>,
      }
      %c0_22 = arith.constant 0 : index
      %c0_23 = arith.constant 0 : index
      %c0_24 = arith.constant 0 : index
      %62 = vector.load %arg5[%c0_22, %c0_23, %c0_24] : memref<2x576x128xf32, #tpu.memory_space<vmem>>, vector<2x576x128xf32>
      %63 = vector.shape_cast %62 : vector<2x576x128xf32> to vector<2x24x24x128xf32>
      %64 = vector.broadcast %22 : i32 to vector<1x24x1x128xi32>
      %65 = arith.cmpi sge, %0, %64 : vector<1x24x1x128xi32>
      %66 = vector.broadcast %25 : i32 to vector<1x24x1x128xi32>
      %67 = arith.cmpi slt, %0, %66 : vector<1x24x1x128xi32>
      %68 = arith.andi %65, %67 : vector<1x24x1x128xi1>
      %cst = arith.constant 0.000000e+00 : f32
      %cst_25 = arith.constant 0xFF800000 : f32
      %69 = vector.broadcast %cst : f32 to vector<1x24x1x128xf32>
      %70 = vector.broadcast %cst_25 : f32 to vector<1x24x1x128xf32>
      %71 = arith.select %68, %69, %70 : vector<1x24x1x128xi1>, vector<1x24x1x128xf32>
      %72 = vector.broadcast %28 : i32 to vector<1x24x1x128xi32>
      %73 = arith.cmpi sge, %0, %72 : vector<1x24x1x128xi32>
      %74 = vector.broadcast %31 : i32 to vector<1x24x1x128xi32>
      %75 = arith.cmpi slt, %0, %74 : vector<1x24x1x128xi32>
      %76 = arith.andi %73, %75 : vector<1x24x1x128xi1>
      %cst_26 = arith.constant 0.000000e+00 : f32
      %cst_27 = arith.constant 0xFF800000 : f32
      %77 = vector.broadcast %cst_26 : f32 to vector<1x24x1x128xf32>
      %78 = vector.broadcast %cst_27 : f32 to vector<1x24x1x128xf32>
      %79 = arith.select %76, %77, %78 : vector<1x24x1x128xi1>, vector<1x24x1x128xf32>
      %80 = vector.broadcast %71 : vector<1x24x1x128xf32> to vector<2x24x24x128xf32>
      %81 = arith.addf %63, %80 : vector<2x24x24x128xf32>
      %cst_28 = arith.constant dense<0xFF800000> : vector<2x24x128xf32>
      %82 = vector.multi_reduction <maximumf>, %81, %cst_28 [1] : vector<2x24x24x128xf32> to vector<2x24x128xf32>
      %83 = vector.broadcast %79 : vector<1x24x1x128xf32> to vector<2x24x24x128xf32>
      %84 = arith.addf %63, %83 : vector<2x24x24x128xf32>
      %cst_29 = arith.constant dense<0xFF800000> : vector<2x24x128xf32>
      %85 = vector.multi_reduction <maximumf>, %84, %cst_29 [1] : vector<2x24x24x128xf32> to vector<2x24x128xf32>
      %86 = vector.shape_cast %82 : vector<2x24x128xf32> to vector<2x1x24x128xf32>
      %87 = vector.shape_cast %85 : vector<2x24x128xf32> to vector<2x1x24x128xf32>
      %88 = tpu.concatenate %86, %87 in 1 : vector<2x1x24x128xf32>, vector<2x1x24x128xf32> -> vector<2x2x24x128xf32>
      %89 = vector.broadcast %34 : i32 to vector<1x1x24x128xi32>
      %90 = arith.cmpi sge, %1, %89 : vector<1x1x24x128xi32>
      %91 = vector.broadcast %37 : i32 to vector<1x1x24x128xi32>
      %92 = arith.cmpi slt, %1, %91 : vector<1x1x24x128xi32>
      %93 = arith.andi %90, %92 : vector<1x1x24x128xi1>
      %cst_30 = arith.constant 0.000000e+00 : f32
      %cst_31 = arith.constant 0xFF800000 : f32
      %94 = vector.broadcast %cst_30 : f32 to vector<1x1x24x128xf32>
      %95 = vector.broadcast %cst_31 : f32 to vector<1x1x24x128xf32>
      %96 = arith.select %93, %94, %95 : vector<1x1x24x128xi1>, vector<1x1x24x128xf32>
      %97 = vector.broadcast %40 : i32 to vector<1x1x24x128xi32>
      %98 = arith.cmpi sge, %1, %97 : vector<1x1x24x128xi32>
      %99 = vector.broadcast %43 : i32 to vector<1x1x24x128xi32>
      %100 = arith.cmpi slt, %1, %99 : vector<1x1x24x128xi32>
      %101 = arith.andi %98, %100 : vector<1x1x24x128xi1>
      %cst_32 = arith.constant 0.000000e+00 : f32
      %cst_33 = arith.constant 0xFF800000 : f32
      %102 = vector.broadcast %cst_32 : f32 to vector<1x1x24x128xf32>
      %103 = vector.broadcast %cst_33 : f32 to vector<1x1x24x128xf32>
      %104 = arith.select %101, %102, %103 : vector<1x1x24x128xi1>, vector<1x1x24x128xf32>
      %105 = vector.broadcast %96 : vector<1x1x24x128xf32> to vector<2x2x24x128xf32>
      %106 = arith.addf %88, %105 : vector<2x2x24x128xf32>
      %cst_34 = arith.constant dense<0xFF800000> : vector<2x2x128xf32>
      %107 = vector.multi_reduction <maximumf>, %106, %cst_34 [2] : vector<2x2x24x128xf32> to vector<2x2x128xf32>
      %108 = vector.broadcast %104 : vector<1x1x24x128xf32> to vector<2x2x24x128xf32>
      %109 = arith.addf %88, %108 : vector<2x2x24x128xf32>
      %cst_35 = arith.constant dense<0xFF800000> : vector<2x2x128xf32>
      %110 = vector.multi_reduction <maximumf>, %109, %cst_35 [2] : vector<2x2x24x128xf32> to vector<2x2x128xf32>
      %111 = vector.shape_cast %107 : vector<2x2x128xf32> to vector<2x2x1x128xf32>
      %112 = vector.shape_cast %110 : vector<2x2x128xf32> to vector<2x2x1x128xf32>
      %113 = tpu.concatenate %111, %112 in 2 : vector<2x2x1x128xf32>, vector<2x2x1x128xf32> -> vector<2x2x2x128xf32>
      %114 = vector.shape_cast %113 : vector<2x2x2x128xf32> to vector<8x128xf32>
      %c0_36 = arith.constant 0 : index
      %115 = arith.index_cast %arg6 : i32 to index
      %c0_37 = arith.constant 0 : index
      %c0_38 = arith.constant 0 : index
      %116 = vector.load %arg4[%c0_36, %115, %c0_37, %c0_38] : memref<1x5x8x128xf32, #tpu.memory_space<vmem>>, vector<1x1x8x128xf32>
      %117 = vector.shape_cast %116 : vector<1x1x8x128xf32> to vector<8x128xf32>
      %118 = vector.shape_cast %114 : vector<8x128xf32> to vector<1x1x8x128xf32>
      tpu.vector_store %arg4[%c0_36, %115, %c0_37, %c0_38], %118 {strides = array<i32>} : memref<1x5x8x128xf32, #tpu.memory_space<vmem>>, vector<1x1x8x128xf32>,
    }
    %c5_i32_0 = arith.constant 5 : i32
    return
  }
  func.func @transform_0(%arg0: i32, %arg1: i32) -> i32 {
    %c0_i32 = arith.constant 0 : i32
    %c0_i32_0 = arith.constant 0 : i32
    return %c0_i32 : i32
  }
  func.func @transform_1(%arg0: i32, %arg1: i32) -> (i32, i32, i32, i32) {
    %c0_i32 = arith.constant 0 : i32
    %c0_i32_0 = arith.constant 0 : i32
    %c0_i32_1 = arith.constant 0 : i32
    %c0_i32_2 = arith.constant 0 : i32
    return %arg0, %c0_i32, %c0_i32_0, %c0_i32_1 : i32, i32, i32, i32
  }
  func.func @transform_2(%arg0: i32, %arg1: i32) -> (i32, i32, i32, i32) {
    %c0_i32 = arith.constant 0 : i32
    %c0_i32_0 = arith.constant 0 : i32
    %c0_i32_1 = arith.constant 0 : i32
    return %arg0, %arg1, %c0_i32, %c0_i32_0 : i32, i32, i32, i32
  }
}

</mosaic_0001>

<llo_original>
// kernel: tpu_custom_call.1
$region0: #{tpu_custom_call.1}
  #allocation0 [shape = 'u32[]', space=smem, size = 0x4, offset = 0x4, fixed_abs, tag = 'smem constant byte address 0x4 - core index']
  #allocation1 [shape = 'u32[72,128]{1,0:T(1,128)}', space=vmem, size = 0x9000, scoped, tag = 'internal scratch']
  #allocation2 [shape = 'f32[2,576,128]{2,1,0:T(8,128)}', space=vmem, size = 0x90000, scoped, tag = 'scratch operand']
  %s0 = inlined_call_operand.hbm [shape: s32[240], index: 0, kind: input, shape index: {}]
  %s1 = inlined_call_operand.hbm [shape: f32[2,24,576,128], index: 1, kind: input, shape index: {}]
  %s2 = inlined_call_operand.hbm [shape: f32[2,10,8,128], index: 2, kind: output, shape index: {}]
  %s3 = sld [smem:[#allocation0]]
  $region70: #{tpu_custom_call.1} parent=0
    _
  %s5 = ssub.s32 1, %s3
  %s6 = scalar_select 0, %s5, %s3
  $region1: #{tpu_custom_call.1} parent=0
    #allocation3 [shape = 'u8[1024]{0}', space=smem, size = 0x400, scoped, tag = 'input window, operand 0, single buffered']
    #allocation4 [shape = 's32[2]{0}', space=sflag, size = 0x8, scoped, tag = 'scoped memory for tpu_custom_call.1']
    #allocation5 [shape = 's32[2]{0}', space=sflag, size = 0x8, scoped, tag = 'scoped memory for tpu_custom_call.1']
    #allocation6 [shape = 's32[2]{0}', space=sflag, size = 0x8, scoped, tag = 'scoped memory for tpu_custom_call.1']
    #allocation7 [shape = 'u8[14155776]{0}', space=vmem, size = 0xd80000, scoped, tag = 'input window, operand 1']
    #allocation8 [shape = 'u8[40960]{0}', space=vmem, size = 0xa000, scoped, tag = 'output window, operand 0']
    %7 = vsyncpa [#allocation6], 0
    %8 = vsyncpa [#allocation4], 0
    %s9 = scalar_lea.sflag [#allocation4], 1
    %10 = vsyncpa %s9, 0
    %11 = vsyncpa [#allocation5], 0
    %s12 = scalar_lea.sflag [#allocation5], 1
    %13 = vsyncpa %s12, 0
    loop: start=0, step=1, limit=6
    $region2: #{tpu_custom_call.1} parent=1 // loop_pre_header
      _
    $region3: #{tpu_custom_call.1} parent=1 // loop_header
      %s15 = sphi 0, %s19
      %p16 = scmp.ge.s32.totalorder %s15, 6
      %s22 = sphi 0, %s34
      %s23 = sphi 0, %s30
      %s24 = sphi 0, %s22
      %s25 = sphi 0, %s23
      %s26 = sphi 0, %s24
      %s27 = sphi 0, %s25
      %s35 = sphi 0, %s35
      %s37 = sphi 0, %s35
      %s38 = sphi 0, %s37
      %s52 = sphi 0, %s38
      %s58 = sphi 0, %s60
      %s61 = sphi 0, %s58
      %s62 = sphi 0, %s61
      %s78 = sphi 0, %s62
      %s86 = sphi 0, %s88
      %s89 = sphi 0, %s86
      %s90 = sphi 0, %s89
      %s106 = sphi 0, %s90
    $region4: #{tpu_custom_call.1} parent=1 // loop_header_branch
      %18 = sbr.rel (%p16) target = $region8
    $region5: #{tpu_custom_call.1} parent=1 // loop_body
      %s20 = ssub.s32 %s15, 1
      %s21 = ssub.s32 %s15, 2
      %s28 = sadd.s32 1, %s23
      %p29 = scmp.ge.s32.totalorder %s28, 2
      %s30 = scalar_select %p29, 0, %s28
      %s31 = sadd.s32 1, %s22
      %s32 = scalar_select %p29, %s31, %s22
      %p33 = scmp.ge.s32.totalorder %s32, 2
      %s34 = scalar_select %p33, 0, %s32
      %s36 = sadd.s32 %s35, 1
      %p39 = scmp.eq.s32.totalorder %s15, 3
      %p40 = scmp.ne.s32.totalorder %s35, %s37
      %p41 = scmp.eq.s32.totalorder %s15, 0
      %p42 = por %p40, %p41
      %p43 = scmp.ne.s32.totalorder %s35, %s37
      %p44 = scmp.eq.s32.totalorder %s20, 3
      %p45 = por %p43, %p44
      %p46 = scmp.ne.s32.totalorder %s37, %s38
      %p47 = scmp.eq.s32.totalorder %s20, 0
      %p48 = por %p46, %p47
      %p49 = scmp.ne.s32.totalorder %s37, %s38
      %p50 = scmp.eq.s32.totalorder %s21, 3
      %p51 = por %p49, %p50
      %p53 = scmp.ne.s32.totalorder %s38, %s52
      %p54 = scmp.eq.s32.totalorder %s21, 0
      %p55 = por %p53, %p54
      %s56 = ssub.s32 %s22, %s34
      %p57 = scmp.eq.s32.totalorder %s56, 0
      %s59 = sadd.s32 %s58, 1
      %s60 = scalar_select %p57, %s58, %s59
      %p63 = pneg %p57
      %p64 = scmp.eq.s32.totalorder %s15, 3
      %p65 = por %p63, %p64
      %p66 = scmp.ne.s32.totalorder %s58, %s61
      %p67 = scmp.eq.s32.totalorder %s15, 0
      %p68 = por %p66, %p67
      %p69 = scmp.ne.s32.totalorder %s58, %s61
      %p70 = scmp.eq.s32.totalorder %s20, 3
      %p71 = por %p69, %p70
      %p72 = scmp.ne.s32.totalorder %s61, %s62
      %p73 = scmp.eq.s32.totalorder %s20, 0
      %p74 = por %p72, %p73
      %p75 = scmp.ne.s32.totalorder %s61, %s62
      %p76 = scmp.eq.s32.totalorder %s21, 3
      %p77 = por %p75, %p76
      %p79 = scmp.ne.s32.totalorder %s62, %s78
      %p80 = scmp.eq.s32.totalorder %s21, 0
      %p81 = por %p79, %p80
      %s82 = ssub.s32 %s22, %s34
      %s83 = ssub.s32 %s23, %s30
      %s84 = sor.u32 %s82, %s83
      %p85 = scmp.eq.s32.totalorder %s84, 0
      %s87 = sadd.s32 %s86, 1
      %s88 = scalar_select %p85, %s86, %s87
      %p91 = pneg %p85
      %p92 = scmp.eq.s32.totalorder %s15, 3
      %p93 = por %p91, %p92
      %p94 = scmp.ne.s32.totalorder %s86, %s89
      %p95 = scmp.eq.s32.totalorder %s15, 0
      %p96 = por %p94, %p95
      %p97 = scmp.ne.s32.totalorder %s86, %s89
      %p98 = scmp.eq.s32.totalorder %s20, 3
      %p99 = por %p97, %p98
      %p100 = scmp.ne.s32.totalorder %s89, %s90
      %p101 = scmp.eq.s32.totalorder %s20, 0
      %p102 = por %p100, %p101
      %p103 = scmp.ne.s32.totalorder %s89, %s90
      %p104 = scmp.eq.s32.totalorder %s21, 3
      %p105 = por %p103, %p104
      %p107 = scmp.ne.s32.totalorder %s90, %s106
      %p108 = scmp.eq.s32.totalorder %s21, 0
      %p109 = por %p107, %p108
      %p110 = scmp.le.s32.totalorder 1, %s15
      %p111 = scmp.lt.s32.totalorder %s15, 5
      %p112 = pnand %p110, %p111
      %p113 = pneg %p112
      // Predicated region
      $region9: #{tpu_custom_call.1} parent=5 // pred_check
        _
      $region10: #{tpu_custom_call.1} parent=5 // pred_check_branch
        %115 = sbr.rel (%p112) target = $region12
      $region11: #{tpu_custom_call.1} parent=5 // pred_region
        %s116 = ssub.s32 %s15, 1
        // Predicated region
        $region13: #{tpu_custom_call.1} parent=11 // pred_check
          %p117 = pneg %p48
        $region14: #{tpu_custom_call.1} parent=11 // pred_check_branch
          %119 = sbr.rel (%p117) target = $region16
        $region15: #{tpu_custom_call.1} parent=11 // pred_region
          %121 = vsyncadd [#allocation6], 0
          %s123 = sshll.u32 %s0, 4
          %s124 = int_to_ptr.hbm [resolvable:$true] %s123
          %126 = dma.hbm_to_smem %s124, 32, [#allocation3], [#allocation6]
        $region16: #{tpu_custom_call.1} parent=11 // pred_fallthru
          _
      $region12: #{tpu_custom_call.1} parent=5 // pred_fallthru
        _
      %p127 = scmp.lt.s32.totalorder %s15, 4
      // Predicated region
      $region17: #{tpu_custom_call.1} parent=5 // pred_check
        %p128 = pneg %p127
      $region18: #{tpu_custom_call.1} parent=5 // pred_check_branch
        %130 = sbr.rel (%p128) target = $region20
      $region19: #{tpu_custom_call.1} parent=5 // pred_region
        // Predicated region
        $region21: #{tpu_custom_call.1} parent=19 // pred_check
          %p131 = pneg %p68
        $region22: #{tpu_custom_call.1} parent=19 // pred_check_branch
          %133 = sbr.rel (%p131) target = $region24
        $region23: #{tpu_custom_call.1} parent=19 // pred_region
          %s134 = sand.u32 %s58, 1
          %s135 = scalar_lea.sflag [#allocation4], %s134
          %s136 = sand.u32 %s58, 1
          %s137 = smul.addr %s136, 13824
          %s138 = scalar_lea.vmem [#allocation7], %s137
          %140 = vsyncadd %s135, 0
          %s141 = smul.addr %s22, 1728
          %s142 = smul.addr %s141, 8
          %s143 = scalar_lea.hbm %s1, %s142
          %s144 = sshll.u32 %s143, 4
          %s145 = int_to_ptr.hbm [resolvable:$true] %s144
          %s146 = sshll.u32 %s138, 4
          %s147 = int_to_ptr.vmem [resolvable:$true] %s146
          %152 = dma.hbm_to_vmem [thread:$0]  %s145, 221184, %s147, %s135, 128, 128, 8
        $region24: #{tpu_custom_call.1} parent=19 // pred_fallthru
          _
      $region20: #{tpu_custom_call.1} parent=5 // pred_fallthru
        _
      %p153 = scmp.le.s32.totalorder 1, %s15
      %p154 = scmp.lt.s32.totalorder %s15, 5
      %p155 = pnand %p153, %p154
      %p156 = pneg %p155
      // Predicated region
      $region25: #{tpu_custom_call.1} parent=5 // pred_check
        _
      $region26: #{tpu_custom_call.1} parent=5 // pred_check_branch
        %158 = sbr.rel (%p155) target = $region28
      $region27: #{tpu_custom_call.1} parent=5 // pred_region
        %s159 = ssub.s32 %s15, 1
        // Predicated region
        $region29: #{tpu_custom_call.1} parent=27 // pred_check
          %p160 = pneg %p48
        $region30: #{tpu_custom_call.1} parent=27 // pred_check_branch
          %162 = sbr.rel (%p160) target = $region32
        $region31: #{tpu_custom_call.1} parent=27 // pred_region
          %164 = dma.done [#allocation6], 32
        $region32: #{tpu_custom_call.1} parent=27 // pred_fallthru
          _
        %s165 = sand.u32 %s61, 1
        %s166 = scalar_lea.sflag [#allocation4], %s165
        %s167 = sand.u32 %s61, 1
        %s168 = smul.addr %s167, 13824
        %s169 = scalar_lea.vmem [#allocation7], %s168
        // Predicated region
        $region33: #{tpu_custom_call.1} parent=27 // pred_check
          %p170 = pneg %p74
        $region34: #{tpu_custom_call.1} parent=27 // pred_check_branch
          %172 = sbr.rel (%p170) target = $region36
        $region35: #{tpu_custom_call.1} parent=27 // pred_region
          %174 = dma.done %s166, 221184
        $region36: #{tpu_custom_call.1} parent=27 // pred_fallthru
          _
        %175 = sfence
        %p176 = pneg %p48
        %p177 = pneg %p45
        %s178 = sand.u32 %s61, 1
        %s179 = scalar_lea.sflag [#allocation4], %s178
        %s180 = sand.u32 %s61, 1
        %s181 = smul.addr %s180, 13824
        %s182 = scalar_lea.vmem [#allocation7], %s181
        %p183 = pneg %p74
        %p184 = pneg %p71
        %p185 = pneg %p102
        %p186 = pneg %p99
        %s187 = sand.u32 %s89, 1
        %s188 = scalar_lea.sflag [#allocation5], %s187
        %s189 = sand.u32 %s89, 1
        %s190 = smul.addr %s189, 40
        %s191 = scalar_lea.vmem [#allocation8], %s190
        %s192 = smul.u32 5, %s25
        %v193 = vlaneseq
        %v194 = vshrl.u32 %v193, 7
        %v195 = vadd.s32 %v194, 8
        %v196 = vadd.s32 %v194, 16
        loop: start=0, step=1, limit=5
        $region37: #{tpu_custom_call.1} parent=27 // loop_pre_header
          _
        $region38: #{tpu_custom_call.1} parent=27 // loop_header
          %s198 = sphi 0, %s202
          %p199 = scmp.ge.s32.totalorder %s198, 5
        $region39: #{tpu_custom_call.1} parent=27 // loop_header_branch
          %201 = sbr.rel (%p199) target = $region43
        $region40: #{tpu_custom_call.1} parent=27 // loop_body
          %s203 = smul.u32 %s24, 2
          %s204 = sadd.s32 %s203, %s25
          %s205 = smul.u32 %s204, 5
          %s206 = sadd.s32 %s205, %s198
          %s207 = smul.u32 %s206, 12
          %s208 = sld [smem:[#allocation3 + %s207]]
          %s209 = sadd.s32 %s207, 1
          %s210 = sld [smem:[#allocation3 + %s209]]
          %s211 = sadd.s32 %s207, 2
          %s212 = sld [smem:[#allocation3 + %s211]]
          %s213 = sadd.s32 %s207, 3
          %s214 = sld [smem:[#allocation3 + %s213]]
          %s215 = sadd.s32 %s207, 4
          %s216 = sld [smem:[#allocation3 + %s215]]
          %s217 = sadd.s32 %s207, 5
          %s218 = sld [smem:[#allocation3 + %s217]]
          %s219 = sadd.s32 %s207, 6
          %s220 = sld [smem:[#allocation3 + %s219]]
          %s221 = sadd.s32 %s207, 7
          %s222 = sld [smem:[#allocation3 + %s221]]
          %s223 = sadd.s32 %s207, 8
          %s224 = sld [smem:[#allocation3 + %s223]]
          %s225 = sadd.s32 %s207, 9
          %s226 = sld [smem:[#allocation3 + %s225]]
          %s227 = sadd.s32 %s207, 10
          %s228 = sld [smem:[#allocation3 + %s227]]
          %s229 = sadd.s32 %s207, 11
          %s230 = sld [smem:[#allocation3 + %s229]]
          %s231 = smul.u32 %s208, 576
          %s232 = scalar_lea.vmem %s169, %s231 [#allocation7]
          %v233 = vld [vmem:[%s232] sm:$0xff]
          %v234 = vld [vmem:[%s232 + $0x8] sm:$0xff]
          %v235 = vld [vmem:[%s232 + $0x10] sm:$0xff]
          %v236 = vld [vmem:[%s232 + $0x18] sm:$0xff]
          %v237 = vld [vmem:[%s232 + $0x20] sm:$0xff]
          %v238 = vld [vmem:[%s232 + $0x28] sm:$0xff]
          %v239 = vld [vmem:[%s232 + $0x30] sm:$0xff]
          %v240 = vld [vmem:[%s232 + $0x38] sm:$0xff]
          %v241 = vld [vmem:[%s232 + $0x40] sm:$0xff]
          %v242 = vld [vmem:[%s232 + $0x48] sm:$0xff]
          %v243 = vld [vmem:[%s232 + $0x50] sm:$0xff]
          %v244 = vld [vmem:[%s232 + $0x58] sm:$0xff]
          %v245 = vld [vmem:[%s232 + $0x60] sm:$0xff]
          %v246 = vld [vmem:[%s232 + $0x68] sm:$0xff]
          %v247 = vld [vmem:[%s232 + $0x70] sm:$0xff]
          %v248 = vld [vmem:[%s232 + $0x78] sm:$0xff]
          %v249 = vld [vmem:[%s232 + $0x80] sm:$0xff]
          %v250 = vld [vmem:[%s232 + $0x88] sm:$0xff]
          %v251 = vld [vmem:[%s232 + $0x90] sm:$0xff]
          %v252 = vld [vmem:[%s232 + $0x98] sm:$0xff]
          %v253 = vld [vmem:[%s232 + $0xa0] sm:$0xff]
          %v254 = vld [vmem:[%s232 + $0xa8] sm:$0xff]
          %v255 = vld [vmem:[%s232 + $0xb0] sm:$0xff]
          %v256 = vld [vmem:[%s232 + $0xb8] sm:$0xff]
          %v257 = vld [vmem:[%s232 + $0xc0] sm:$0xff]
          %v258 = vld [vmem:[%s232 + $0xc8] sm:$0xff]
          %v259 = vld [vmem:[%s232 + $0xd0] sm:$0xff]
          %v260 = vld [vmem:[%s232 + $0xd8] sm:$0xff]
          %v261 = vld [vmem:[%s232 + $0xe0] sm:$0xff]
          %v262 = vld [vmem:[%s232 + $0xe8] sm:$0xff]
          %v263 = vld [vmem:[%s232 + $0xf0] sm:$0xff]
          %v264 = vld [vmem:[%s232 + $0xf8] sm:$0xff]
          %v265 = vld [vmem:[%s232 + $0x100] sm:$0xff]
          %v266 = vld [vmem:[%s232 + $0x108] sm:$0xff]
          %v267 = vld [vmem:[%s232 + $0x110] sm:$0xff]
          %v268 = vld [vmem:[%s232 + $0x118] sm:$0xff]
          %v269 = vld [vmem:[%s232 + $0x120] sm:$0xff]
          %v270 = vld [vmem:[%s232 + $0x128] sm:$0xff]
          %v271 = vld [vmem:[%s232 + $0x130] sm:$0xff]
          %v272 = vld [vmem:[%s232 + $0x138] sm:$0xff]
          %v273 = vld [vmem:[%s232 + $0x140] sm:$0xff]
          %v274 = vld [vmem:[%s232 + $0x148] sm:$0xff]
          %v275 = vld [vmem:[%s232 + $0x150] sm:$0xff]
          %v276 = vld [vmem:[%s232 + $0x158] sm:$0xff]
          %v277 = vld [vmem:[%s232 + $0x160] sm:$0xff]
          %v278 = vld [vmem:[%s232 + $0x168] sm:$0xff]
          %v279 = vld [vmem:[%s232 + $0x170] sm:$0xff]
          %v280 = vld [vmem:[%s232 + $0x178] sm:$0xff]
          %v281 = vld [vmem:[%s232 + $0x180] sm:$0xff]
          %v282 = vld [vmem:[%s232 + $0x188] sm:$0xff]
          %v283 = vld [vmem:[%s232 + $0x190] sm:$0xff]
          %v284 = vld [vmem:[%s232 + $0x198] sm:$0xff]
          %v285 = vld [vmem:[%s232 + $0x1a0] sm:$0xff]
          %v286 = vld [vmem:[%s232 + $0x1a8] sm:$0xff]
          %v287 = vld [vmem:[%s232 + $0x1b0] sm:$0xff]
          %v288 = vld [vmem:[%s232 + $0x1b8] sm:$0xff]
          %v289 = vld [vmem:[%s232 + $0x1c0] sm:$0xff]
          %v290 = vld [vmem:[%s232 + $0x1c8] sm:$0xff]
          %v291 = vld [vmem:[%s232 + $0x1d0] sm:$0xff]
          %v292 = vld [vmem:[%s232 + $0x1d8] sm:$0xff]
          %v293 = vld [vmem:[%s232 + $0x1e0] sm:$0xff]
          %v294 = vld [vmem:[%s232 + $0x1e8] sm:$0xff]
          %v295 = vld [vmem:[%s232 + $0x1f0] sm:$0xff]
          %v296 = vld [vmem:[%s232 + $0x1f8] sm:$0xff]
          %v297 = vld [vmem:[%s232 + $0x200] sm:$0xff]
          %v298 = vld [vmem:[%s232 + $0x208] sm:$0xff]
          %v299 = vld [vmem:[%s232 + $0x210] sm:$0xff]
          %v300 = vld [vmem:[%s232 + $0x218] sm:$0xff]
          %v301 = vld [vmem:[%s232 + $0x220] sm:$0xff]
          %v302 = vld [vmem:[%s232 + $0x228] sm:$0xff]
          %v303 = vld [vmem:[%s232 + $0x230] sm:$0xff]
          %v304 = vld [vmem:[%s232 + $0x238] sm:$0xff]
          %305 = vst [vmem:[#allocation2] sm:$0xff] %v233
          %306 = vst [vmem:[#allocation2 + $0x8] sm:$0xff] %v234
          %307 = vst [vmem:[#allocation2 + $0x10] sm:$0xff] %v235
          %308 = vst [vmem:[#allocation2 + $0x18] sm:$0xff] %v236
          %309 = vst [vmem:[#allocation2 + $0x20] sm:$0xff] %v237
          %310 = vst [vmem:[#allocation2 + $0x28] sm:$0xff] %v238
          %311 = vst [vmem:[#allocation2 + $0x30] sm:$0xff] %v239
          %312 = vst [vmem:[#allocation2 + $0x38] sm:$0xff] %v240
          %313 = vst [vmem:[#allocation2 + $0x40] sm:$0xff] %v241
          %314 = vst [vmem:[#allocation2 + $0x48] sm:$0xff] %v242
          %315 = vst [vmem:[#allocation2 + $0x50] sm:$0xff] %v243
          %316 = vst [vmem:[#allocation2 + $0x58] sm:$0xff] %v244
          %317 = vst [vmem:[#allocation2 + $0x60] sm:$0xff] %v245
          %318 = vst [vmem:[#allocation2 + $0x68] sm:$0xff] %v246
          %319 = vst [vmem:[#allocation2 + $0x70] sm:$0xff] %v247
          %320 = vst [vmem:[#allocation2 + $0x78] sm:$0xff] %v248
          %321 = vst [vmem:[#allocation2 + $0x80] sm:$0xff] %v249
          %322 = vst [vmem:[#allocation2 + $0x88] sm:$0xff] %v250
          %323 = vst [vmem:[#allocation2 + $0x90] sm:$0xff] %v251
          %324 = vst [vmem:[#allocation2 + $0x98] sm:$0xff] %v252
          %325 = vst [vmem:[#allocation2 + $0xa0] sm:$0xff] %v253
          %326 = vst [vmem:[#allocation2 + $0xa8] sm:$0xff] %v254
          %327 = vst [vmem:[#allocation2 + $0xb0] sm:$0xff] %v255
          %328 = vst [vmem:[#allocation2 + $0xb8] sm:$0xff] %v256
          %329 = vst [vmem:[#allocation2 + $0xc0] sm:$0xff] %v257
          %330 = vst [vmem:[#allocation2 + $0xc8] sm:$0xff] %v258
          %331 = vst [vmem:[#allocation2 + $0xd0] sm:$0xff] %v259
          %332 = vst [vmem:[#allocation2 + $0xd8] sm:$0xff] %v260
          %333 = vst [vmem:[#allocation2 + $0xe0] sm:$0xff] %v261
          %334 = vst [vmem:[#allocation2 + $0xe8] sm:$0xff] %v262
          %335 = vst [vmem:[#allocation2 + $0xf0] sm:$0xff] %v263
          %336 = vst [vmem:[#allocation2 + $0xf8] sm:$0xff] %v264
          %337 = vst [vmem:[#allocation2 + $0x100] sm:$0xff] %v265
          %338 = vst [vmem:[#allocation2 + $0x108] sm:$0xff] %v266
          %339 = vst [vmem:[#allocation2 + $0x110] sm:$0xff] %v267
          %340 = vst [vmem:[#allocation2 + $0x118] sm:$0xff] %v268
          %341 = vst [vmem:[#allocation2 + $0x120] sm:$0xff] %v269
          %342 = vst [vmem:[#allocation2 + $0x128] sm:$0xff] %v270
          %343 = vst [vmem:[#allocation2 + $0x130] sm:$0xff] %v271
          %344 = vst [vmem:[#allocation2 + $0x138] sm:$0xff] %v272
          %345 = vst [vmem:[#allocation2 + $0x140] sm:$0xff] %v273
          %346 = vst [vmem:[#allocation2 + $0x148] sm:$0xff] %v274
          %347 = vst [vmem:[#allocation2 + $0x150] sm:$0xff] %v275
          %348 = vst [vmem:[#allocation2 + $0x158] sm:$0xff] %v276
          %349 = vst [vmem:[#allocation2 + $0x160] sm:$0xff] %v277
          %350 = vst [vmem:[#allocation2 + $0x168] sm:$0xff] %v278
          %351 = vst [vmem:[#allocation2 + $0x170] sm:$0xff] %v279
          %352 = vst [vmem:[#allocation2 + $0x178] sm:$0xff] %v280
          %353 = vst [vmem:[#allocation2 + $0x180] sm:$0xff] %v281
          %354 = vst [vmem:[#allocation2 + $0x188] sm:$0xff] %v282
          %355 = vst [vmem:[#allocation2 + $0x190] sm:$0xff] %v283
          %356 = vst [vmem:[#allocation2 + $0x198] sm:$0xff] %v284
          %357 = vst [vmem:[#allocation2 + $0x1a0] sm:$0xff] %v285
          %358 = vst [vmem:[#allocation2 + $0x1a8] sm:$0xff] %v286
          %359 = vst [vmem:[#allocation2 + $0x1b0] sm:$0xff] %v287
          %360 = vst [vmem:[#allocation2 + $0x1b8] sm:$0xff] %v288
          %361 = vst [vmem:[#allocation2 + $0x1c0] sm:$0xff] %v289
          %362 = vst [vmem:[#allocation2 + $0x1c8] sm:$0xff] %v290
          %363 = vst [vmem:[#allocation2 + $0x1d0] sm:$0xff] %v291
          %364 = vst [vmem:[#allocation2 + $0x1d8] sm:$0xff] %v292
          %365 = vst [vmem:[#allocation2 + $0x1e0] sm:$0xff] %v293
          %366 = vst [vmem:[#allocation2 + $0x1e8] sm:$0xff] %v294
          %367 = vst [vmem:[#allocation2 + $0x1f0] sm:$0xff] %v295
          %368 = vst [vmem:[#allocation2 + $0x1f8] sm:$0xff] %v296
          %369 = vst [vmem:[#allocation2 + $0x200] sm:$0xff] %v297
          %370 = vst [vmem:[#allocation2 + $0x208] sm:$0xff] %v298
          %371 = vst [vmem:[#allocation2 + $0x210] sm:$0xff] %v299
          %372 = vst [vmem:[#allocation2 + $0x218] sm:$0xff] %v300
          %373 = vst [vmem:[#allocation2 + $0x220] sm:$0xff] %v301
          %374 = vst [vmem:[#allocation2 + $0x228] sm:$0xff] %v302
          %375 = vst [vmem:[#allocation2 + $0x230] sm:$0xff] %v303
          %376 = vst [vmem:[#allocation2 + $0x238] sm:$0xff] %v304
          %s377 = sadd.s32 %s208, 1
          // While loop
          $region44: #{tpu_custom_call.1} parent=40 // loop_pre_header
            _
          $region45: #{tpu_custom_call.1} parent=40 // loop_header
            %s379 = sphi %s377, %s381
            %p380 = scmp.ge.s32.totalorder %s379, %s210
          $region46: #{tpu_custom_call.1} parent=40 // loop_header_branch
            %383 = sbr.rel (%p380) target = $region50
          $region47: #{tpu_custom_call.1} parent=40 // loop_body
            %v384 = vld [vmem:[#allocation2] sm:$0xff]
            %v385 = vld [vmem:[#allocation2 + $0x8] sm:$0xff]
            %v386 = vld [vmem:[#allocation2 + $0x10] sm:$0xff]
            %v387 = vld [vmem:[#allocation2 + $0x18] sm:$0xff]
            %v388 = vld [vmem:[#allocation2 + $0x20] sm:$0xff]
            %v389 = vld [vmem:[#allocation2 + $0x28] sm:$0xff]
            %v390 = vld [vmem:[#allocation2 + $0x30] sm:$0xff]
            %v391 = vld [vmem:[#allocation2 + $0x38] sm:$0xff]
            %v392 = vld [vmem:[#allocation2 + $0x40] sm:$0xff]
            %v393 = vld [vmem:[#allocation2 + $0x48] sm:$0xff]
            %v394 = vld [vmem:[#allocation2 + $0x50] sm:$0xff]
            %v395 = vld [vmem:[#allocation2 + $0x58] sm:$0xff]
            %v396 = vld [vmem:[#allocation2 + $0x60] sm:$0xff]
            %v397 = vld [vmem:[#allocation2 + $0x68] sm:$0xff]
            %v398 = vld [vmem:[#allocation2 + $0x70] sm:$0xff]
            %v399 = vld [vmem:[#allocation2 + $0x78] sm:$0xff]
            %v400 = vld [vmem:[#allocation2 + $0x80] sm:$0xff]
            %v401 = vld [vmem:[#allocation2 + $0x88] sm:$0xff]
            %v402 = vld [vmem:[#allocation2 + $0x90] sm:$0xff]
            %v403 = vld [vmem:[#allocation2 + $0x98] sm:$0xff]
            %v404 = vld [vmem:[#allocation2 + $0xa0] sm:$0xff]
            %v405 = vld [vmem:[#allocation2 + $0xa8] sm:$0xff]
            %v406 = vld [vmem:[#allocation2 + $0xb0] sm:$0xff]
            %v407 = vld [vmem:[#allocation2 + $0xb8] sm:$0xff]
            %v408 = vld [vmem:[#allocation2 + $0xc0] sm:$0xff]
            %v409 = vld [vmem:[#allocation2 + $0xc8] sm:$0xff]
            %v410 = vld [vmem:[#allocation2 + $0xd0] sm:$0xff]
            %v411 = vld [vmem:[#allocation2 + $0xd8] sm:$0xff]
            %v412 = vld [vmem:[#allocation2 + $0xe0] sm:$0xff]
            %v413 = vld [vmem:[#allocation2 + $0xe8] sm:$0xff]
            %v414 = vld [vmem:[#allocation2 + $0xf0] sm:$0xff]
            %v415 = vld [vmem:[#allocation2 + $0xf8] sm:$0xff]
            %v416 = vld [vmem:[#allocation2 + $0x100] sm:$0xff]
            %v417 = vld [vmem:[#allocation2 + $0x108] sm:$0xff]
            %v418 = vld [vmem:[#allocation2 + $0x110] sm:$0xff]
            %v419 = vld [vmem:[#allocation2 + $0x118] sm:$0xff]
            %v420 = vld [vmem:[#allocation2 + $0x120] sm:$0xff]
            %v421 = vld [vmem:[#allocation2 + $0x128] sm:$0xff]
            %v422 = vld [vmem:[#allocation2 + $0x130] sm:$0xff]
            %v423 = vld [vmem:[#allocation2 + $0x138] sm:$0xff]
            %v424 = vld [vmem:[#allocation2 + $0x140] sm:$0xff]
            %v425 = vld [vmem:[#allocation2 + $0x148] sm:$0xff]
            %v426 = vld [vmem:[#allocation2 + $0x150] sm:$0xff]
            %v427 = vld [vmem:[#allocation2 + $0x158] sm:$0xff]
            %v428 = vld [vmem:[#allocation2 + $0x160] sm:$0xff]
            %v429 = vld [vmem:[#allocation2 + $0x168] sm:$0xff]
            %v430 = vld [vmem:[#allocation2 + $0x170] sm:$0xff]
            %v431 = vld [vmem:[#allocation2 + $0x178] sm:$0xff]
            %v432 = vld [vmem:[#allocation2 + $0x180] sm:$0xff]
            %v433 = vld [vmem:[#allocation2 + $0x188] sm:$0xff]
            %v434 = vld [vmem:[#allocation2 + $0x190] sm:$0xff]
            %v435 = vld [vmem:[#allocation2 + $0x198] sm:$0xff]
            %v436 = vld [vmem:[#allocation2 + $0x1a0] sm:$0xff]
            %v437 = vld [vmem:[#allocation2 + $0x1a8] sm:$0xff]
            %v438 = vld [vmem:[#allocation2 + $0x1b0] sm:$0xff]
            %v439 = vld [vmem:[#allocation2 + $0x1b8] sm:$0xff]
            %v440 = vld [vmem:[#allocation2 + $0x1c0] sm:$0xff]
            %v441 = vld [vmem:[#allocation2 + $0x1c8] sm:$0xff]
            %v442 = vld [vmem:[#allocation2 + $0x1d0] sm:$0xff]
            %v443 = vld [vmem:[#allocation2 + $0x1d8] sm:$0xff]
            %v444 = vld [vmem:[#allocation2 + $0x1e0] sm:$0xff]
            %v445 = vld [vmem:[#allocation2 + $0x1e8] sm:$0xff]
            %v446 = vld [vmem:[#allocation2 + $0x1f0] sm:$0xff]
            %v447 = vld [vmem:[#allocation2 + $0x1f8] sm:$0xff]
            %v448 = vld [vmem:[#allocation2 + $0x200] sm:$0xff]
            %v449 = vld [vmem:[#allocation2 + $0x208] sm:$0xff]
            %v450 = vld [vmem:[#allocation2 + $0x210] sm:$0xff]
            %v451 = vld [vmem:[#allocation2 + $0x218] sm:$0xff]
            %v452 = vld [vmem:[#allocation2 + $0x220] sm:$0xff]
            %v453 = vld [vmem:[#allocation2 + $0x228] sm:$0xff]
            %v454 = vld [vmem:[#allocation2 + $0x230] sm:$0xff]
            %v455 = vld [vmem:[#allocation2 + $0x238] sm:$0xff]
            %s456 = smul.u32 %s379, 576
            %s457 = scalar_lea.vmem %s169, %s456 [#allocation7]
            %v458 = vld [vmem:[%s457] sm:$0xff]
            %v459 = vld [vmem:[%s457 + $0x8] sm:$0xff]
            %v460 = vld [vmem:[%s457 + $0x10] sm:$0xff]
            %v461 = vld [vmem:[%s457 + $0x18] sm:$0xff]
            %v462 = vld [vmem:[%s457 + $0x20] sm:$0xff]
            %v463 = vld [vmem:[%s457 + $0x28] sm:$0xff]
            %v464 = vld [vmem:[%s457 + $0x30] sm:$0xff]
            %v465 = vld [vmem:[%s457 + $0x38] sm:$0xff]
            %v466 = vld [vmem:[%s457 + $0x40] sm:$0xff]
            %v467 = vld [vmem:[%s457 + $0x48] sm:$0xff]
            %v468 = vld [vmem:[%s457 + $0x50] sm:$0xff]
            %v469 = vld [vmem:[%s457 + $0x58] sm:$0xff]
            %v470 = vld [vmem:[%s457 + $0x60] sm:$0xff]
            %v471 = vld [vmem:[%s457 + $0x68] sm:$0xff]
            %v472 = vld [vmem:[%s457 + $0x70] sm:$0xff]
            %v473 = vld [vmem:[%s457 + $0x78] sm:$0xff]
            %v474 = vld [vmem:[%s457 + $0x80] sm:$0xff]
            %v475 = vld [vmem:[%s457 + $0x88] sm:$0xff]
            %v476 = vld [vmem:[%s457 + $0x90] sm:$0xff]
            %v477 = vld [vmem:[%s457 + $0x98] sm:$0xff]
            %v478 = vld [vmem:[%s457 + $0xa0] sm:$0xff]
            %v479 = vld [vmem:[%s457 + $0xa8] sm:$0xff]
            %v480 = vld [vmem:[%s457 + $0xb0] sm:$0xff]
            %v481 = vld [vmem:[%s457 + $0xb8] sm:$0xff]
            %v482 = vld [vmem:[%s457 + $0xc0] sm:$0xff]
            %v483 = vld [vmem:[%s457 + $0xc8] sm:$0xff]
            %v484 = vld [vmem:[%s457 + $0xd0] sm:$0xff]
            %v485 = vld [vmem:[%s457 + $0xd8] sm:$0xff]
            %v486 = vld [vmem:[%s457 + $0xe0] sm:$0xff]
            %v487 = vld [vmem:[%s457 + $0xe8] sm:$0xff]
            %v488 = vld [vmem:[%s457 + $0xf0] sm:$0xff]
            %v489 = vld [vmem:[%s457 + $0xf8] sm:$0xff]
            %v490 = vld [vmem:[%s457 + $0x100] sm:$0xff]
            %v491 = vld [vmem:[%s457 + $0x108] sm:$0xff]
            %v492 = vld [vmem:[%s457 + $0x110] sm:$0xff]
            %v493 = vld [vmem:[%s457 + $0x118] sm:$0xff]
            %v494 = vld [vmem:[%s457 + $0x120] sm:$0xff]
            %v495 = vld [vmem:[%s457 + $0x128] sm:$0xff]
            %v496 = vld [vmem:[%s457 + $0x130] sm:$0xff]
            %v497 = vld [vmem:[%s457 + $0x138] sm:$0xff]
            %v498 = vld [vmem:[%s457 + $0x140] sm:$0xff]
            %v499 = vld [vmem:[%s457 + $0x148] sm:$0xff]
            %v500 = vld [vmem:[%s457 + $0x150] sm:$0xff]
            %v501 = vld [vmem:[%s457 + $0x158] sm:$0xff]
            %v502 = vld [vmem:[%s457 + $0x160] sm:$0xff]
            %v503 = vld [vmem:[%s457 + $0x168] sm:$0xff]
            %v504 = vld [vmem:[%s457 + $0x170] sm:$0xff]
            %v505 = vld [vmem:[%s457 + $0x178] sm:$0xff]
            %v506 = vld [vmem:[%s457 + $0x180] sm:$0xff]
            %v507 = vld [vmem:[%s457 + $0x188] sm:$0xff]
            %v508 = vld [vmem:[%s457 + $0x190] sm:$0xff]
            %v509 = vld [vmem:[%s457 + $0x198] sm:$0xff]
            %v510 = vld [vmem:[%s457 + $0x1a0] sm:$0xff]
            %v511 = vld [vmem:[%s457 + $0x1a8] sm:$0xff]
            %v512 = vld [vmem:[%s457 + $0x1b0] sm:$0xff]
            %v513 = vld [vmem:[%s457 + $0x1b8] sm:$0xff]
            %v514 = vld [vmem:[%s457 + $0x1c0] sm:$0xff]
            %v515 = vld [vmem:[%s457 + $0x1c8] sm:$0xff]
            %v516 = vld [vmem:[%s457 + $0x1d0] sm:$0xff]
            %v517 = vld [vmem:[%s457 + $0x1d8] sm:$0xff]
            %v518 = vld [vmem:[%s457 + $0x1e0] sm:$0xff]
            %v519 = vld [vmem:[%s457 + $0x1e8] sm:$0xff]
            %v520 = vld [vmem:[%s457 + $0x1f0] sm:$0xff]
            %v521 = vld [vmem:[%s457 + $0x1f8] sm:$0xff]
            %v522 = vld [vmem:[%s457 + $0x200] sm:$0xff]
            %v523 = vld [vmem:[%s457 + $0x208] sm:$0xff]
            %v524 = vld [vmem:[%s457 + $0x210] sm:$0xff]
            %v525 = vld [vmem:[%s457 + $0x218] sm:$0xff]
            %v526 = vld [vmem:[%s457 + $0x220] sm:$0xff]
            %v527 = vld [vmem:[%s457 + $0x228] sm:$0xff]
            %v528 = vld [vmem:[%s457 + $0x230] sm:$0xff]
            %v529 = vld [vmem:[%s457 + $0x238] sm:$0xff]
            %v530 = vmax.f32 %v384, %v458
            %v531 = vmax.f32 %v385, %v459
            %v532 = vmax.f32 %v386, %v460
            %v533 = vmax.f32 %v387, %v461
            %v534 = vmax.f32 %v388, %v462
            %v535 = vmax.f32 %v389, %v463
            %v536 = vmax.f32 %v390, %v464
            %v537 = vmax.f32 %v391, %v465
            %v538 = vmax.f32 %v392, %v466
            %v539 = vmax.f32 %v393, %v467
            %v540 = vmax.f32 %v394, %v468
            %v541 = vmax.f32 %v395, %v469
            %v542 = vmax.f32 %v396, %v470
            %v543 = vmax.f32 %v397, %v471
            %v544 = vmax.f32 %v398, %v472
            %v545 = vmax.f32 %v399, %v473
            %v546 = vmax.f32 %v400, %v474
            %v547 = vmax.f32 %v401, %v475
            %v548 = vmax.f32 %v402, %v476
            %v549 = vmax.f32 %v403, %v477
            %v550 = vmax.f32 %v404, %v478
            %v551 = vmax.f32 %v405, %v479
            %v552 = vmax.f32 %v406, %v480
            %v553 = vmax.f32 %v407, %v481
            %v554 = vmax.f32 %v408, %v482
            %v555 = vmax.f32 %v409, %v483
            %v556 = vmax.f32 %v410, %v484
            %v557 = vmax.f32 %v411, %v485
            %v558 = vmax.f32 %v412, %v486
            %v559 = vmax.f32 %v413, %v487
            %v560 = vmax.f32 %v414, %v488
            %v561 = vmax.f32 %v415, %v489
            %v562 = vmax.f32 %v416, %v490
            %v563 = vmax.f32 %v417, %v491
            %v564 = vmax.f32 %v418, %v492
            %v565 = vmax.f32 %v419, %v493
            %v566 = vmax.f32 %v420, %v494
            %v567 = vmax.f32 %v421, %v495
            %v568 = vmax.f32 %v422, %v496
            %v569 = vmax.f32 %v423, %v497
            %v570 = vmax.f32 %v424, %v498
            %v571 = vmax.f32 %v425, %v499
            %v572 = vmax.f32 %v426, %v500
            %v573 = vmax.f32 %v427, %v501
            %v574 = vmax.f32 %v428, %v502
            %v575 = vmax.f32 %v429, %v503
            %v576 = vmax.f32 %v430, %v504
            %v577 = vmax.f32 %v431, %v505
            %v578 = vmax.f32 %v432, %v506
            %v579 = vmax.f32 %v433, %v507
            %v580 = vmax.f32 %v434, %v508
            %v581 = vmax.f32 %v435, %v509
            %v582 = vmax.f32 %v436, %v510
            %v583 = vmax.f32 %v437, %v511
            %v584 = vmax.f32 %v438, %v512
            %v585 = vmax.f32 %v439, %v513
            %v586 = vmax.f32 %v440, %v514
            %v587 = vmax.f32 %v441, %v515
            %v588 = vmax.f32 %v442, %v516
            %v589 = vmax.f32 %v443, %v517
            %v590 = vmax.f32 %v444, %v518
            %v591 = vmax.f32 %v445, %v519
            %v592 = vmax.f32 %v446, %v520
            %v593 = vmax.f32 %v447, %v521
            %v594 = vmax.f32 %v448, %v522
            %v595 = vmax.f32 %v449, %v523
            %v596 = vmax.f32 %v450, %v524
            %v597 = vmax.f32 %v451, %v525
            %v598 = vmax.f32 %v452, %v526
            %v599 = vmax.f32 %v453, %v527
            %v600 = vmax.f32 %v454, %v528
            %v601 = vmax.f32 %v455, %v529
            %602 = vst [vmem:[#allocation2] sm:$0xff] %v530
            %603 = vst [vmem:[#allocation2 + $0x8] sm:$0xff] %v531
            %604 = vst [vmem:[#allocation2 + $0x10] sm:$0xff] %v532
            %605 = vst [vmem:[#allocation2 + $0x18] sm:$0xff] %v533
            %606 = vst [vmem:[#allocation2 + $0x20] sm:$0xff] %v534
            %607 = vst [vmem:[#allocation2 + $0x28] sm:$0xff] %v535
            %608 = vst [vmem:[#allocation2 + $0x30] sm:$0xff] %v536
            %609 = vst [vmem:[#allocation2 + $0x38] sm:$0xff] %v537
            %610 = vst [vmem:[#allocation2 + $0x40] sm:$0xff] %v538
            %611 = vst [vmem:[#allocation2 + $0x48] sm:$0xff] %v539
            %612 = vst [vmem:[#allocation2 + $0x50] sm:$0xff] %v540
            %613 = vst [vmem:[#allocation2 + $0x58] sm:$0xff] %v541
            %614 = vst [vmem:[#allocation2 + $0x60] sm:$0xff] %v542
            %615 = vst [vmem:[#allocation2 + $0x68] sm:$0xff] %v543
            %616 = vst [vmem:[#allocation2 + $0x70] sm:$0xff] %v544
            %617 = vst [vmem:[#allocation2 + $0x78] sm:$0xff] %v545
            %618 = vst [vmem:[#allocation2 + $0x80] sm:$0xff] %v546
            %619 = vst [vmem:[#allocation2 + $0x88] sm:$0xff] %v547
            %620 = vst [vmem:[#allocation2 + $0x90] sm:$0xff] %v548
            %621 = vst [vmem:[#allocation2 + $0x98] sm:$0xff] %v549
            %622 = vst [vmem:[#allocation2 + $0xa0] sm:$0xff] %v550
            %623 = vst [vmem:[#allocation2 + $0xa8] sm:$0xff] %v551
            %624 = vst [vmem:[#allocation2 + $0xb0] sm:$0xff] %v552
            %625 = vst [vmem:[#allocation2 + $0xb8] sm:$0xff] %v553
            %626 = vst [vmem:[#allocation2 + $0xc0] sm:$0xff] %v554
            %627 = vst [vmem:[#allocation2 + $0xc8] sm:$0xff] %v555
            %628 = vst [vmem:[#allocation2 + $0xd0] sm:$0xff] %v556
            %629 = vst [vmem:[#allocation2 + $0xd8] sm:$0xff] %v557
            %630 = vst [vmem:[#allocation2 + $0xe0] sm:$0xff] %v558
            %631 = vst [vmem:[#allocation2 + $0xe8] sm:$0xff] %v559
            %632 = vst [vmem:[#allocation2 + $0xf0] sm:$0xff] %v560
            %633 = vst [vmem:[#allocation2 + $0xf8] sm:$0xff] %v561
            %634 = vst [vmem:[#allocation2 + $0x100] sm:$0xff] %v562
            %635 = vst [vmem:[#allocation2 + $0x108] sm:$0xff] %v563
            %636 = vst [vmem:[#allocation2 + $0x110] sm:$0xff] %v564
            %637 = vst [vmem:[#allocation2 + $0x118] sm:$0xff] %v565
            %638 = vst [vmem:[#allocation2 + $0x120] sm:$0xff] %v566
            %639 = vst [vmem:[#allocation2 + $0x128] sm:$0xff] %v567
            %640 = vst [vmem:[#allocation2 + $0x130] sm:$0xff] %v568
            %641 = vst [vmem:[#allocation2 + $0x138] sm:$0xff] %v569
            %642 = vst [vmem:[#allocation2 + $0x140] sm:$0xff] %v570
            %643 = vst [vmem:[#allocation2 + $0x148] sm:$0xff] %v571
            %644 = vst [vmem:[#allocation2 + $0x150] sm:$0xff] %v572
            %645 = vst [vmem:[#allocation2 + $0x158] sm:$0xff] %v573
            %646 = vst [vmem:[#allocation2 + $0x160] sm:$0xff] %v574
            %647 = vst [vmem:[#allocation2 + $0x168] sm:$0xff] %v575
            %648 = vst [vmem:[#allocation2 + $0x170] sm:$0xff] %v576
            %649 = vst [vmem:[#allocation2 + $0x178] sm:$0xff] %v577
            %650 = vst [vmem:[#allocation2 + $0x180] sm:$0xff] %v578
            %651 = vst [vmem:[#allocation2 + $0x188] sm:$0xff] %v579
            %652 = vst [vmem:[#allocation2 + $0x190] sm:$0xff] %v580
            %653 = vst [vmem:[#allocation2 + $0x198] sm:$0xff] %v581
            %654 = vst [vmem:[#allocation2 + $0x1a0] sm:$0xff] %v582
            %655 = vst [vmem:[#allocation2 + $0x1a8] sm:$0xff] %v583
            %656 = vst [vmem:[#allocation2 + $0x1b0] sm:$0xff] %v584
            %657 = vst [vmem:[#allocation2 + $0x1b8] sm:$0xff] %v585
            %658 = vst [vmem:[#allocation2 + $0x1c0] sm:$0xff] %v586
            %659 = vst [vmem:[#allocation2 + $0x1c8] sm:$0xff] %v587
            %660 = vst [vmem:[#allocation2 + $0x1d0] sm:$0xff] %v588
            %661 = vst [vmem:[#allocation2 + $0x1d8] sm:$0xff] %v589
            %662 = vst [vmem:[#allocation2 + $0x1e0] sm:$0xff] %v590
            %663 = vst [vmem:[#allocation2 + $0x1e8] sm:$0xff] %v591
            %664 = vst [vmem:[#allocation2 + $0x1f0] sm:$0xff] %v592
            %665 = vst [vmem:[#allocation2 + $0x1f8] sm:$0xff] %v593
            %666 = vst [vmem:[#allocation2 + $0x200] sm:$0xff] %v594
            %667 = vst [vmem:[#allocation2 + $0x208] sm:$0xff] %v595
            %668 = vst [vmem:[#allocation2 + $0x210] sm:$0xff] %v596
            %669 = vst [vmem:[#allocation2 + $0x218] sm:$0xff] %v597
            %670 = vst [vmem:[#allocation2 + $0x220] sm:$0xff] %v598
            %671 = vst [vmem:[#allocation2 + $0x228] sm:$0xff] %v599
            %672 = vst [vmem:[#allocation2 + $0x230] sm:$0xff] %v600
            %673 = vst [vmem:[#allocation2 + $0x238] sm:$0xff] %v601
          $region48: #{tpu_custom_call.1} parent=40 // loop_footer
            %s381 = sadd.s32 %s379, 1
          $region49: #{tpu_custom_call.1} parent=40 // loop_footer_branch
            %378 = sbr.rel target = $region45
          $region50: #{tpu_custom_call.1} parent=40 // loop_exit
            _
          %s674 = smul.u32 %s212, 576
          %s675 = scalar_lea.vmem %s169, %s674 [#allocation7]
          %v676 = vld [vmem:[%s675] sm:$0xff]
          %v677 = vld [vmem:[%s675 + $0x8] sm:$0xff]
          %v678 = vld [vmem:[%s675 + $0x10] sm:$0xff]
          %v679 = vld [vmem:[%s675 + $0x18] sm:$0xff]
          %v680 = vld [vmem:[%s675 + $0x20] sm:$0xff]
          %v681 = vld [vmem:[%s675 + $0x28] sm:$0xff]
          %v682 = vld [vmem:[%s675 + $0x30] sm:$0xff]
          %v683 = vld [vmem:[%s675 + $0x38] sm:$0xff]
          %v684 = vld [vmem:[%s675 + $0x40] sm:$0xff]
          %v685 = vld [vmem:[%s675 + $0x48] sm:$0xff]
          %v686 = vld [vmem:[%s675 + $0x50] sm:$0xff]
          %v687 = vld [vmem:[%s675 + $0x58] sm:$0xff]
          %v688 = vld [vmem:[%s675 + $0x60] sm:$0xff]
          %v689 = vld [vmem:[%s675 + $0x68] sm:$0xff]
          %v690 = vld [vmem:[%s675 + $0x70] sm:$0xff]
          %v691 = vld [vmem:[%s675 + $0x78] sm:$0xff]
          %v692 = vld [vmem:[%s675 + $0x80] sm:$0xff]
          %v693 = vld [vmem:[%s675 + $0x88] sm:$0xff]
          %v694 = vld [vmem:[%s675 + $0x90] sm:$0xff]
          %v695 = vld [vmem:[%s675 + $0x98] sm:$0xff]
          %v696 = vld [vmem:[%s675 + $0xa0] sm:$0xff]
          %v697 = vld [vmem:[%s675 + $0xa8] sm:$0xff]
          %v698 = vld [vmem:[%s675 + $0xb0] sm:$0xff]
          %v699 = vld [vmem:[%s675 + $0xb8] sm:$0xff]
          %v700 = vld [vmem:[%s675 + $0xc0] sm:$0xff]
          %v701 = vld [vmem:[%s675 + $0xc8] sm:$0xff]
          %v702 = vld [vmem:[%s675 + $0xd0] sm:$0xff]
          %v703 = vld [vmem:[%s675 + $0xd8] sm:$0xff]
          %v704 = vld [vmem:[%s675 + $0xe0] sm:$0xff]
          %v705 = vld [vmem:[%s675 + $0xe8] sm:$0xff]
          %v706 = vld [vmem:[%s675 + $0xf0] sm:$0xff]
          %v707 = vld [vmem:[%s675 + $0xf8] sm:$0xff]
          %v708 = vld [vmem:[%s675 + $0x100] sm:$0xff]
          %v709 = vld [vmem:[%s675 + $0x108] sm:$0xff]
          %v710 = vld [vmem:[%s675 + $0x110] sm:$0xff]
          %v711 = vld [vmem:[%s675 + $0x118] sm:$0xff]
          %v712 = vld [vmem:[%s675 + $0x120] sm:$0xff]
          %v713 = vld [vmem:[%s675 + $0x128] sm:$0xff]
          %v714 = vld [vmem:[%s675 + $0x130] sm:$0xff]
          %v715 = vld [vmem:[%s675 + $0x138] sm:$0xff]
          %v716 = vld [vmem:[%s675 + $0x140] sm:$0xff]
          %v717 = vld [vmem:[%s675 + $0x148] sm:$0xff]
          %v718 = vld [vmem:[%s675 + $0x150] sm:$0xff]
          %v719 = vld [vmem:[%s675 + $0x158] sm:$0xff]
          %v720 = vld [vmem:[%s675 + $0x160] sm:$0xff]
          %v721 = vld [vmem:[%s675 + $0x168] sm:$0xff]
          %v722 = vld [vmem:[%s675 + $0x170] sm:$0xff]
          %v723 = vld [vmem:[%s675 + $0x178] sm:$0xff]
          %v724 = vld [vmem:[%s675 + $0x180] sm:$0xff]
          %v725 = vld [vmem:[%s675 + $0x188] sm:$0xff]
          %v726 = vld [vmem:[%s675 + $0x190] sm:$0xff]
          %v727 = vld [vmem:[%s675 + $0x198] sm:$0xff]
          %v728 = vld [vmem:[%s675 + $0x1a0] sm:$0xff]
          %v729 = vld [vmem:[%s675 + $0x1a8] sm:$0xff]
          %v730 = vld [vmem:[%s675 + $0x1b0] sm:$0xff]
          %v731 = vld [vmem:[%s675 + $0x1b8] sm:$0xff]
          %v732 = vld [vmem:[%s675 + $0x1c0] sm:$0xff]
          %v733 = vld [vmem:[%s675 + $0x1c8] sm:$0xff]
          %v734 = vld [vmem:[%s675 + $0x1d0] sm:$0xff]
          %v735 = vld [vmem:[%s675 + $0x1d8] sm:$0xff]
          %v736 = vld [vmem:[%s675 + $0x1e0] sm:$0xff]
          %v737 = vld [vmem:[%s675 + $0x1e8] sm:$0xff]
          %v738 = vld [vmem:[%s675 + $0x1f0] sm:$0xff]
          %v739 = vld [vmem:[%s675 + $0x1f8] sm:$0xff]
          %v740 = vld [vmem:[%s675 + $0x200] sm:$0xff]
          %v741 = vld [vmem:[%s675 + $0x208] sm:$0xff]
          %v742 = vld [vmem:[%s675 + $0x210] sm:$0xff]
          %v743 = vld [vmem:[%s675 + $0x218] sm:$0xff]
          %v744 = vld [vmem:[%s675 + $0x220] sm:$0xff]
          %v745 = vld [vmem:[%s675 + $0x228] sm:$0xff]
          %v746 = vld [vmem:[%s675 + $0x230] sm:$0xff]
          %v747 = vld [vmem:[%s675 + $0x238] sm:$0xff]
          %s748 = scalar_lea.vmem [#allocation2], 576
          %749 = vst [vmem:[%s748] sm:$0xff] %v676
          %750 = vst [vmem:[%s748 + $0x8] sm:$0xff] %v677
          %751 = vst [vmem:[%s748 + $0x10] sm:$0xff] %v678
          %752 = vst [vmem:[%s748 + $0x18] sm:$0xff] %v679
          %753 = vst [vmem:[%s748 + $0x20] sm:$0xff] %v680
          %754 = vst [vmem:[%s748 + $0x28] sm:$0xff] %v681
          %755 = vst [vmem:[%s748 + $0x30] sm:$0xff] %v682
          %756 = vst [vmem:[%s748 + $0x38] sm:$0xff] %v683
          %757 = vst [vmem:[%s748 + $0x40] sm:$0xff] %v684
          %758 = vst [vmem:[%s748 + $0x48] sm:$0xff] %v685
          %759 = vst [vmem:[%s748 + $0x50] sm:$0xff] %v686
          %760 = vst [vmem:[%s748 + $0x58] sm:$0xff] %v687
          %761 = vst [vmem:[%s748 + $0x60] sm:$0xff] %v688
          %762 = vst [vmem:[%s748 + $0x68] sm:$0xff] %v689
          %763 = vst [vmem:[%s748 + $0x70] sm:$0xff] %v690
          %764 = vst [vmem:[%s748 + $0x78] sm:$0xff] %v691
          %765 = vst [vmem:[%s748 + $0x80] sm:$0xff] %v692
          %766 = vst [vmem:[%s748 + $0x88] sm:$0xff] %v693
          %767 = vst [vmem:[%s748 + $0x90] sm:$0xff] %v694
          %768 = vst [vmem:[%s748 + $0x98] sm:$0xff] %v695
          %769 = vst [vmem:[%s748 + $0xa0] sm:$0xff] %v696
          %770 = vst [vmem:[%s748 + $0xa8] sm:$0xff] %v697
          %771 = vst [vmem:[%s748 + $0xb0] sm:$0xff] %v698
          %772 = vst [vmem:[%s748 + $0xb8] sm:$0xff] %v699
          %773 = vst [vmem:[%s748 + $0xc0] sm:$0xff] %v700
          %774 = vst [vmem:[%s748 + $0xc8] sm:$0xff] %v701
          %775 = vst [vmem:[%s748 + $0xd0] sm:$0xff] %v702
          %776 = vst [vmem:[%s748 + $0xd8] sm:$0xff] %v703
          %777 = vst [vmem:[%s748 + $0xe0] sm:$0xff] %v704
          %778 = vst [vmem:[%s748 + $0xe8] sm:$0xff] %v705
          %779 = vst [vmem:[%s748 + $0xf0] sm:$0xff] %v706
          %780 = vst [vmem:[%s748 + $0xf8] sm:$0xff] %v707
          %781 = vst [vmem:[%s748 + $0x100] sm:$0xff] %v708
          %782 = vst [vmem:[%s748 + $0x108] sm:$0xff] %v709
          %783 = vst [vmem:[%s748 + $0x110] sm:$0xff] %v710
          %784 = vst [vmem:[%s748 + $0x118] sm:$0xff] %v711
          %785 = vst [vmem:[%s748 + $0x120] sm:$0xff] %v712
          %786 = vst [vmem:[%s748 + $0x128] sm:$0xff] %v713
          %787 = vst [vmem:[%s748 + $0x130] sm:$0xff] %v714
          %788 = vst [vmem:[%s748 + $0x138] sm:$0xff] %v715
          %789 = vst [vmem:[%s748 + $0x140] sm:$0xff] %v716
          %790 = vst [vmem:[%s748 + $0x148] sm:$0xff] %v717
          %791 = vst [vmem:[%s748 + $0x150] sm:$0xff] %v718
          %792 = vst [vmem:[%s748 + $0x158] sm:$0xff] %v719
          %793 = vst [vmem:[%s748 + $0x160] sm:$0xff] %v720
          %794 = vst [vmem:[%s748 + $0x168] sm:$0xff] %v721
          %795 = vst [vmem:[%s748 + $0x170] sm:$0xff] %v722
          %796 = vst [vmem:[%s748 + $0x178] sm:$0xff] %v723
          %797 = vst [vmem:[%s748 + $0x180] sm:$0xff] %v724
          %798 = vst [vmem:[%s748 + $0x188] sm:$0xff] %v725
          %799 = vst [vmem:[%s748 + $0x190] sm:$0xff] %v726
          %800 = vst [vmem:[%s748 + $0x198] sm:$0xff] %v727
          %801 = vst [vmem:[%s748 + $0x1a0] sm:$0xff] %v728
          %802 = vst [vmem:[%s748 + $0x1a8] sm:$0xff] %v729
          %803 = vst [vmem:[%s748 + $0x1b0] sm:$0xff] %v730
          %804 = vst [vmem:[%s748 + $0x1b8] sm:$0xff] %v731
          %805 = vst [vmem:[%s748 + $0x1c0] sm:$0xff] %v732
          %806 = vst [vmem:[%s748 + $0x1c8] sm:$0xff] %v733
          %807 = vst [vmem:[%s748 + $0x1d0] sm:$0xff] %v734
          %808 = vst [vmem:[%s748 + $0x1d8] sm:$0xff] %v735
          %809 = vst [vmem:[%s748 + $0x1e0] sm:$0xff] %v736
          %810 = vst [vmem:[%s748 + $0x1e8] sm:$0xff] %v737
          %811 = vst [vmem:[%s748 + $0x1f0] sm:$0xff] %v738
          %812 = vst [vmem:[%s748 + $0x1f8] sm:$0xff] %v739
          %813 = vst [vmem:[%s748 + $0x200] sm:$0xff] %v740
          %814 = vst [vmem:[%s748 + $0x208] sm:$0xff] %v741
          %815 = vst [vmem:[%s748 + $0x210] sm:$0xff] %v742
          %816 = vst [vmem:[%s748 + $0x218] sm:$0xff] %v743
          %817 = vst [vmem:[%s748 + $0x220] sm:$0xff] %v744
          %818 = vst [vmem:[%s748 + $0x228] sm:$0xff] %v745
          %819 = vst [vmem:[%s748 + $0x230] sm:$0xff] %v746
          %820 = vst [vmem:[%s748 + $0x238] sm:$0xff] %v747
          %s821 = sadd.s32 %s212, 1
          // While loop
          $region51: #{tpu_custom_call.1} parent=40 // loop_pre_header
            _
          $region52: #{tpu_custom_call.1} parent=40 // loop_header
            %s823 = sphi %s821, %s825
            %p824 = scmp.ge.s32.totalorder %s823, %s214
          $region53: #{tpu_custom_call.1} parent=40 // loop_header_branch
            %827 = sbr.rel (%p824) target = $region57
          $region54: #{tpu_custom_call.1} parent=40 // loop_body
            %v828 = vld [vmem:[%s748] sm:$0xff]
            %v829 = vld [vmem:[%s748 + $0x8] sm:$0xff]
            %v830 = vld [vmem:[%s748 + $0x10] sm:$0xff]
            %v831 = vld [vmem:[%s748 + $0x18] sm:$0xff]
            %v832 = vld [vmem:[%s748 + $0x20] sm:$0xff]
            %v833 = vld [vmem:[%s748 + $0x28] sm:$0xff]
            %v834 = vld [vmem:[%s748 + $0x30] sm:$0xff]
            %v835 = vld [vmem:[%s748 + $0x38] sm:$0xff]
            %v836 = vld [vmem:[%s748 + $0x40] sm:$0xff]
            %v837 = vld [vmem:[%s748 + $0x48] sm:$0xff]
            %v838 = vld [vmem:[%s748 + $0x50] sm:$0xff]
            %v839 = vld [vmem:[%s748 + $0x58] sm:$0xff]
            %v840 = vld [vmem:[%s748 + $0x60] sm:$0xff]
            %v841 = vld [vmem:[%s748 + $0x68] sm:$0xff]
            %v842 = vld [vmem:[%s748 + $0x70] sm:$0xff]
            %v843 = vld [vmem:[%s748 + $0x78] sm:$0xff]
            %v844 = vld [vmem:[%s748 + $0x80] sm:$0xff]
            %v845 = vld [vmem:[%s748 + $0x88] sm:$0xff]
            %v846 = vld [vmem:[%s748 + $0x90] sm:$0xff]
            %v847 = vld [vmem:[%s748 + $0x98] sm:$0xff]
            %v848 = vld [vmem:[%s748 + $0xa0] sm:$0xff]
            %v849 = vld [vmem:[%s748 + $0xa8] sm:$0xff]
            %v850 = vld [vmem:[%s748 + $0xb0] sm:$0xff]
            %v851 = vld [vmem:[%s748 + $0xb8] sm:$0xff]
            %v852 = vld [vmem:[%s748 + $0xc0] sm:$0xff]
            %v853 = vld [vmem:[%s748 + $0xc8] sm:$0xff]
            %v854 = vld [vmem:[%s748 + $0xd0] sm:$0xff]
            %v855 = vld [vmem:[%s748 + $0xd8] sm:$0xff]
            %v856 = vld [vmem:[%s748 + $0xe0] sm:$0xff]
            %v857 = vld [vmem:[%s748 + $0xe8] sm:$0xff]
            %v858 = vld [vmem:[%s748 + $0xf0] sm:$0xff]
            %v859 = vld [vmem:[%s748 + $0xf8] sm:$0xff]
            %v860 = vld [vmem:[%s748 + $0x100] sm:$0xff]
            %v861 = vld [vmem:[%s748 + $0x108] sm:$0xff]
            %v862 = vld [vmem:[%s748 + $0x110] sm:$0xff]
            %v863 = vld [vmem:[%s748 + $0x118] sm:$0xff]
            %v864 = vld [vmem:[%s748 + $0x120] sm:$0xff]
            %v865 = vld [vmem:[%s748 + $0x128] sm:$0xff]
            %v866 = vld [vmem:[%s748 + $0x130] sm:$0xff]
            %v867 = vld [vmem:[%s748 + $0x138] sm:$0xff]
            %v868 = vld [vmem:[%s748 + $0x140] sm:$0xff]
            %v869 = vld [vmem:[%s748 + $0x148] sm:$0xff]
            %v870 = vld [vmem:[%s748 + $0x150] sm:$0xff]
            %v871 = vld [vmem:[%s748 + $0x158] sm:$0xff]
            %v872 = vld [vmem:[%s748 + $0x160] sm:$0xff]
            %v873 = vld [vmem:[%s748 + $0x168] sm:$0xff]
            %v874 = vld [vmem:[%s748 + $0x170] sm:$0xff]
            %v875 = vld [vmem:[%s748 + $0x178] sm:$0xff]
            %v876 = vld [vmem:[%s748 + $0x180] sm:$0xff]
            %v877 = vld [vmem:[%s748 + $0x188] sm:$0xff]
            %v878 = vld [vmem:[%s748 + $0x190] sm:$0xff]
            %v879 = vld [vmem:[%s748 + $0x198] sm:$0xff]
            %v880 = vld [vmem:[%s748 + $0x1a0] sm:$0xff]
            %v881 = vld [vmem:[%s748 + $0x1a8] sm:$0xff]
            %v882 = vld [vmem:[%s748 + $0x1b0] sm:$0xff]
            %v883 = vld [vmem:[%s748 + $0x1b8] sm:$0xff]
            %v884 = vld [vmem:[%s748 + $0x1c0] sm:$0xff]
            %v885 = vld [vmem:[%s748 + $0x1c8] sm:$0xff]
            %v886 = vld [vmem:[%s748 + $0x1d0] sm:$0xff]
            %v887 = vld [vmem:[%s748 + $0x1d8] sm:$0xff]
            %v888 = vld [vmem:[%s748 + $0x1e0] sm:$0xff]
            %v889 = vld [vmem:[%s748 + $0x1e8] sm:$0xff]
            %v890 = vld [vmem:[%s748 + $0x1f0] sm:$0xff]
            %v891 = vld [vmem:[%s748 + $0x1f8] sm:$0xff]
            %v892 = vld [vmem:[%s748 + $0x200] sm:$0xff]
            %v893 = vld [vmem:[%s748 + $0x208] sm:$0xff]
            %v894 = vld [vmem:[%s748 + $0x210] sm:$0xff]
            %v895 = vld [vmem:[%s748 + $0x218] sm:$0xff]
            %v896 = vld [vmem:[%s748 + $0x220] sm:$0xff]
            %v897 = vld [vmem:[%s748 + $0x228] sm:$0xff]
            %v898 = vld [vmem:[%s748 + $0x230] sm:$0xff]
            %v899 = vld [vmem:[%s748 + $0x238] sm:$0xff]
            %s900 = smul.u32 %s823, 576
            %s901 = scalar_lea.vmem %s169, %s900 [#allocation7]
            %v902 = vld [vmem:[%s901] sm:$0xff]
            %v903 = vld [vmem:[%s901 + $0x8] sm:$0xff]
            %v904 = vld [vmem:[%s901 + $0x10] sm:$0xff]
            %v905 = vld [vmem:[%s901 + $0x18] sm:$0xff]
            %v906 = vld [vmem:[%s901 + $0x20] sm:$0xff]
            %v907 = vld [vmem:[%s901 + $0x28] sm:$0xff]
            %v908 = vld [vmem:[%s901 + $0x30] sm:$0xff]
            %v909 = vld [vmem:[%s901 + $0x38] sm:$0xff]
            %v910 = vld [vmem:[%s901 + $0x40] sm:$0xff]
            %v911 = vld [vmem:[%s901 + $0x48] sm:$0xff]
            %v912 = vld [vmem:[%s901 + $0x50] sm:$0xff]
            %v913 = vld [vmem:[%s901 + $0x58] sm:$0xff]
            %v914 = vld [vmem:[%s901 + $0x60] sm:$0xff]
            %v915 = vld [vmem:[%s901 + $0x68] sm:$0xff]
            %v916 = vld [vmem:[%s901 + $0x70] sm:$0xff]
            %v917 = vld [vmem:[%s901 + $0x78] sm:$0xff]
            %v918 = vld [vmem:[%s901 + $0x80] sm:$0xff]
            %v919 = vld [vmem:[%s901 + $0x88] sm:$0xff]
            %v920 = vld [vmem:[%s901 + $0x90] sm:$0xff]
            %v921 = vld [vmem:[%s901 + $0x98] sm:$0xff]
            %v922 = vld [vmem:[%s901 + $0xa0] sm:$0xff]
            %v923 = vld [vmem:[%s901 + $0xa8] sm:$0xff]
            %v924 = vld [vmem:[%s901 + $0xb0] sm:$0xff]
            %v925 = vld [vmem:[%s901 + $0xb8] sm:$0xff]
            %v926 = vld [vmem:[%s901 + $0xc0] sm:$0xff]
            %v927 = vld [vmem:[%s901 + $0xc8] sm:$0xff]
            %v928 = vld [vmem:[%s901 + $0xd0] sm:$0xff]
            %v929 = vld [vmem:[%s901 + $0xd8] sm:$0xff]
            %v930 = vld [vmem:[%s901 + $0xe0] sm:$0xff]
            %v931 = vld [vmem:[%s901 + $0xe8] sm:$0xff]
            %v932 = vld [vmem:[%s901 + $0xf0] sm:$0xff]
            %v933 = vld [vmem:[%s901 + $0xf8] sm:$0xff]
            %v934 = vld [vmem:[%s901 + $0x100] sm:$0xff]
            %v935 = vld [vmem:[%s901 + $0x108] sm:$0xff]
            %v936 = vld [vmem:[%s901 + $0x110] sm:$0xff]
            %v937 = vld [vmem:[%s901 + $0x118] sm:$0xff]
            %v938 = vld [vmem:[%s901 + $0x120] sm:$0xff]
            %v939 = vld [vmem:[%s901 + $0x128] sm:$0xff]
            %v940 = vld [vmem:[%s901 + $0x130] sm:$0xff]
            %v941 = vld [vmem:[%s901 + $0x138] sm:$0xff]
            %v942 = vld [vmem:[%s901 + $0x140] sm:$0xff]
            %v943 = vld [vmem:[%s901 + $0x148] sm:$0xff]
            %v944 = vld [vmem:[%s901 + $0x150] sm:$0xff]
            %v945 = vld [vmem:[%s901 + $0x158] sm:$0xff]
            %v946 = vld [vmem:[%s901 + $0x160] sm:$0xff]
            %v947 = vld [vmem:[%s901 + $0x168] sm:$0xff]
            %v948 = vld [vmem:[%s901 + $0x170] sm:$0xff]
            %v949 = vld [vmem:[%s901 + $0x178] sm:$0xff]
            %v950 = vld [vmem:[%s901 + $0x180] sm:$0xff]
            %v951 = vld [vmem:[%s901 + $0x188] sm:$0xff]
            %v952 = vld [vmem:[%s901 + $0x190] sm:$0xff]
            %v953 = vld [vmem:[%s901 + $0x198] sm:$0xff]
            %v954 = vld [vmem:[%s901 + $0x1a0] sm:$0xff]
            %v955 = vld [vmem:[%s901 + $0x1a8] sm:$0xff]
            %v956 = vld [vmem:[%s901 + $0x1b0] sm:$0xff]
            %v957 = vld [vmem:[%s901 + $0x1b8] sm:$0xff]
            %v958 = vld [vmem:[%s901 + $0x1c0] sm:$0xff]
            %v959 = vld [vmem:[%s901 + $0x1c8] sm:$0xff]
            %v960 = vld [vmem:[%s901 + $0x1d0] sm:$0xff]
            %v961 = vld [vmem:[%s901 + $0x1d8] sm:$0xff]
            %v962 = vld [vmem:[%s901 + $0x1e0] sm:$0xff]
            %v963 = vld [vmem:[%s901 + $0x1e8] sm:$0xff]
            %v964 = vld [vmem:[%s901 + $0x1f0] sm:$0xff]
            %v965 = vld [vmem:[%s901 + $0x1f8] sm:$0xff]
            %v966 = vld [vmem:[%s901 + $0x200] sm:$0xff]
            %v967 = vld [vmem:[%s901 + $0x208] sm:$0xff]
            %v968 = vld [vmem:[%s901 + $0x210] sm:$0xff]
            %v969 = vld [vmem:[%s901 + $0x218] sm:$0xff]
            %v970 = vld [vmem:[%s901 + $0x220] sm:$0xff]
            %v971 = vld [vmem:[%s901 + $0x228] sm:$0xff]
            %v972 = vld [vmem:[%s901 + $0x230] sm:$0xff]
            %v973 = vld [vmem:[%s901 + $0x238] sm:$0xff]
            %v974 = vmax.f32 %v828, %v902
            %v975 = vmax.f32 %v829, %v903
            %v976 = vmax.f32 %v830, %v904
            %v977 = vmax.f32 %v831, %v905
            %v978 = vmax.f32 %v832, %v906
            %v979 = vmax.f32 %v833, %v907
            %v980 = vmax.f32 %v834, %v908
            %v981 = vmax.f32 %v835, %v909
            %v982 = vmax.f32 %v836, %v910
            %v983 = vmax.f32 %v837, %v911
            %v984 = vmax.f32 %v838, %v912
            %v985 = vmax.f32 %v839, %v913
            %v986 = vmax.f32 %v840, %v914
            %v987 = vmax.f32 %v841, %v915
            %v988 = vmax.f32 %v842, %v916
            %v989 = vmax.f32 %v843, %v917
            %v990 = vmax.f32 %v844, %v918
            %v991 = vmax.f32 %v845, %v919
            %v992 = vmax.f32 %v846, %v920
            %v993 = vmax.f32 %v847, %v921
            %v994 = vmax.f32 %v848, %v922
            %v995 = vmax.f32 %v849, %v923
            %v996 = vmax.f32 %v850, %v924
            %v997 = vmax.f32 %v851, %v925
            %v998 = vmax.f32 %v852, %v926
            %v999 = vmax.f32 %v853, %v927
            %v1000 = vmax.f32 %v854, %v928
            %v1001 = vmax.f32 %v855, %v929
            %v1002 = vmax.f32 %v856, %v930
            %v1003 = vmax.f32 %v857, %v931
            %v1004 = vmax.f32 %v858, %v932
            %v1005 = vmax.f32 %v859, %v933
            %v1006 = vmax.f32 %v860, %v934
            %v1007 = vmax.f32 %v861, %v935
            %v1008 = vmax.f32 %v862, %v936
            %v1009 = vmax.f32 %v863, %v937
            %v1010 = vmax.f32 %v864, %v938
            %v1011 = vmax.f32 %v865, %v939
            %v1012 = vmax.f32 %v866, %v940
            %v1013 = vmax.f32 %v867, %v941
            %v1014 = vmax.f32 %v868, %v942
            %v1015 = vmax.f32 %v869, %v943
            %v1016 = vmax.f32 %v870, %v944
            %v1017 = vmax.f32 %v871, %v945
            %v1018 = vmax.f32 %v872, %v946
            %v1019 = vmax.f32 %v873, %v947
            %v1020 = vmax.f32 %v874, %v948
            %v1021 = vmax.f32 %v875, %v949
            %v1022 = vmax.f32 %v876, %v950
            %v1023 = vmax.f32 %v877, %v951
            %v1024 = vmax.f32 %v878, %v952
            %v1025 = vmax.f32 %v879, %v953
            %v1026 = vmax.f32 %v880, %v954
            %v1027 = vmax.f32 %v881, %v955
            %v1028 = vmax.f32 %v882, %v956
            %v1029 = vmax.f32 %v883, %v957
            %v1030 = vmax.f32 %v884, %v958
            %v1031 = vmax.f32 %v885, %v959
            %v1032 = vmax.f32 %v886, %v960
            %v1033 = vmax.f32 %v887, %v961
            %v1034 = vmax.f32 %v888, %v962
            %v1035 = vmax.f32 %v889, %v963
            %v1036 = vmax.f32 %v890, %v964
            %v1037 = vmax.f32 %v891, %v965
            %v1038 = vmax.f32 %v892, %v966
            %v1039 = vmax.f32 %v893, %v967
            %v1040 = vmax.f32 %v894, %v968
            %v1041 = vmax.f32 %v895, %v969
            %v1042 = vmax.f32 %v896, %v970
            %v1043 = vmax.f32 %v897, %v971
            %v1044 = vmax.f32 %v898, %v972
            %v1045 = vmax.f32 %v899, %v973
            %1046 = vst [vmem:[%s748] sm:$0xff] %v974
            %1047 = vst [vmem:[%s748 + $0x8] sm:$0xff] %v975
            %1048 = vst [vmem:[%s748 + $0x10] sm:$0xff] %v976
            %1049 = vst [vmem:[%s748 + $0x18] sm:$0xff] %v977
            %1050 = vst [vmem:[%s748 + $0x20] sm:$0xff] %v978
            %1051 = vst [vmem:[%s748 + $0x28] sm:$0xff] %v979
            %1052 = vst [vmem:[%s748 + $0x30] sm:$0xff] %v980
            %1053 = vst [vmem:[%s748 + $0x38] sm:$0xff] %v981
            %1054 = vst [vmem:[%s748 + $0x40] sm:$0xff] %v982
            %1055 = vst [vmem:[%s748 + $0x48] sm:$0xff] %v983
            %1056 = vst [vmem:[%s748 + $0x50] sm:$0xff] %v984
            %1057 = vst [vmem:[%s748 + $0x58] sm:$0xff] %v985
            %1058 = vst [vmem:[%s748 + $0x60] sm:$0xff] %v986
            %1059 = vst [vmem:[%s748 + $0x68] sm:$0xff] %v987
            %1060 = vst [vmem:[%s748 + $0x70] sm:$0xff] %v988
            %1061 = vst [vmem:[%s748 + $0x78] sm:$0xff] %v989
            %1062 = vst [vmem:[%s748 + $0x80] sm:$0xff] %v990
            %1063 = vst [vmem:[%s748 + $0x88] sm:$0xff] %v991
            %1064 = vst [vmem:[%s748 + $0x90] sm:$0xff] %v992
            %1065 = vst [vmem:[%s748 + $0x98] sm:$0xff] %v993
            %1066 = vst [vmem:[%s748 + $0xa0] sm:$0xff] %v994
            %1067 = vst [vmem:[%s748 + $0xa8] sm:$0xff] %v995
            %1068 = vst [vmem:[%s748 + $0xb0] sm:$0xff] %v996
            %1069 = vst [vmem:[%s748 + $0xb8] sm:$0xff] %v997
            %1070 = vst [vmem:[%s748 + $0xc0] sm:$0xff] %v998
            %1071 = vst [vmem:[%s748 + $0xc8] sm:$0xff] %v999
            %1072 = vst [vmem:[%s748 + $0xd0] sm:$0xff] %v1000
            %1073 = vst [vmem:[%s748 + $0xd8] sm:$0xff] %v1001
            %1074 = vst [vmem:[%s748 + $0xe0] sm:$0xff] %v1002
            %1075 = vst [vmem:[%s748 + $0xe8] sm:$0xff] %v1003
            %1076 = vst [vmem:[%s748 + $0xf0] sm:$0xff] %v1004
            %1077 = vst [vmem:[%s748 + $0xf8] sm:$0xff] %v1005
            %1078 = vst [vmem:[%s748 + $0x100] sm:$0xff] %v1006
            %1079 = vst [vmem:[%s748 + $0x108] sm:$0xff] %v1007
            %1080 = vst [vmem:[%s748 + $0x110] sm:$0xff] %v1008
            %1081 = vst [vmem:[%s748 + $0x118] sm:$0xff] %v1009
            %1082 = vst [vmem:[%s748 + $0x120] sm:$0xff] %v1010
            %1083 = vst [vmem:[%s748 + $0x128] sm:$0xff] %v1011
            %1084 = vst [vmem:[%s748 + $0x130] sm:$0xff] %v1012
            %1085 = vst [vmem:[%s748 + $0x138] sm:$0xff] %v1013
            %1086 = vst [vmem:[%s748 + $0x140] sm:$0xff] %v1014
            %1087 = vst [vmem:[%s748 + $0x148] sm:$0xff] %v1015
            %1088 = vst [vmem:[%s748 + $0x150] sm:$0xff] %v1016
            %1089 = vst [vmem:[%s748 + $0x158] sm:$0xff] %v1017
            %1090 = vst [vmem:[%s748 + $0x160] sm:$0xff] %v1018
            %1091 = vst [vmem:[%s748 + $0x168] sm:$0xff] %v1019
            %1092 = vst [vmem:[%s748 + $0x170] sm:$0xff] %v1020
            %1093 = vst [vmem:[%s748 + $0x178] sm:$0xff] %v1021
            %1094 = vst [vmem:[%s748 + $0x180] sm:$0xff] %v1022
            %1095 = vst [vmem:[%s748 + $0x188] sm:$0xff] %v1023
            %1096 = vst [vmem:[%s748 + $0x190] sm:$0xff] %v1024
            %1097 = vst [vmem:[%s748 + $0x198] sm:$0xff] %v1025
            %1098 = vst [vmem:[%s748 + $0x1a0] sm:$0xff] %v1026
            %1099 = vst [vmem:[%s748 + $0x1a8] sm:$0xff] %v1027
            %1100 = vst [vmem:[%s748 + $0x1b0] sm:$0xff] %v1028
            %1101 = vst [vmem:[%s748 + $0x1b8] sm:$0xff] %v1029
            %1102 = vst [vmem:[%s748 + $0x1c0] sm:$0xff] %v1030
            %1103 = vst [vmem:[%s748 + $0x1c8] sm:$0xff] %v1031
            %1104 = vst [vmem:[%s748 + $0x1d0] sm:$0xff] %v1032
            %1105 = vst [vmem:[%s748 + $0x1d8] sm:$0xff] %v1033
            %1106 = vst [vmem:[%s748 + $0x1e0] sm:$0xff] %v1034
            %1107 = vst [vmem:[%s748 + $0x1e8] sm:$0xff] %v1035
            %1108 = vst [vmem:[%s748 + $0x1f0] sm:$0xff] %v1036
            %1109 = vst [vmem:[%s748 + $0x1f8] sm:$0xff] %v1037
            %1110 = vst [vmem:[%s748 + $0x200] sm:$0xff] %v1038
            %1111 = vst [vmem:[%s748 + $0x208] sm:$0xff] %v1039
            %1112 = vst [vmem:[%s748 + $0x210] sm:$0xff] %v1040
            %1113 = vst [vmem:[%s748 + $0x218] sm:$0xff] %v1041
            %1114 = vst [vmem:[%s748 + $0x220] sm:$0xff] %v1042
            %1115 = vst [vmem:[%s748 + $0x228] sm:$0xff] %v1043
            %1116 = vst [vmem:[%s748 + $0x230] sm:$0xff] %v1044
            %1117 = vst [vmem:[%s748 + $0x238] sm:$0xff] %v1045
          $region55: #{tpu_custom_call.1} parent=40 // loop_footer
            %s825 = sadd.s32 %s823, 1
          $region56: #{tpu_custom_call.1} parent=40 // loop_footer_branch
            %822 = sbr.rel target = $region52
          $region57: #{tpu_custom_call.1} parent=40 // loop_exit
            _
          %v1118 = vld [vmem:[#allocation2] sm:$0xff]
          %v1119 = vld [vmem:[#allocation2 + $0x8] sm:$0xff]
          %v1120 = vld [vmem:[#allocation2 + $0x10] sm:$0xff]
          %v1121 = vld [vmem:[#allocation2 + $0x18] sm:$0xff]
          %v1122 = vld [vmem:[#allocation2 + $0x20] sm:$0xff]
          %v1123 = vld [vmem:[#allocation2 + $0x28] sm:$0xff]
          %v1124 = vld [vmem:[#allocation2 + $0x30] sm:$0xff]
          %v1125 = vld [vmem:[#allocation2 + $0x38] sm:$0xff]
          %v1126 = vld [vmem:[#allocation2 + $0x40] sm:$0xff]
          %v1127 = vld [vmem:[#allocation2 + $0x48] sm:$0xff]
          %v1128 = vld [vmem:[#allocation2 + $0x50] sm:$0xff]
          %v1129 = vld [vmem:[#allocation2 + $0x58] sm:$0xff]
          %v1130 = vld [vmem:[#allocation2 + $0x60] sm:$0xff]
          %v1131 = vld [vmem:[#allocation2 + $0x68] sm:$0xff]
          %v1132 = vld [vmem:[#allocation2 + $0x70] sm:$0xff]
          %v1133 = vld [vmem:[#allocation2 + $0x78] sm:$0xff]
          %v1134 = vld [vmem:[#allocation2 + $0x80] sm:$0xff]
          %v1135 = vld [vmem:[#allocation2 + $0x88] sm:$0xff]
          %v1136 = vld [vmem:[#allocation2 + $0x90] sm:$0xff]
          %v1137 = vld [vmem:[#allocation2 + $0x98] sm:$0xff]
          %v1138 = vld [vmem:[#allocation2 + $0xa0] sm:$0xff]
          %v1139 = vld [vmem:[#allocation2 + $0xa8] sm:$0xff]
          %v1140 = vld [vmem:[#allocation2 + $0xb0] sm:$0xff]
          %v1141 = vld [vmem:[#allocation2 + $0xb8] sm:$0xff]
          %v1142 = vld [vmem:[#allocation2 + $0xc0] sm:$0xff]
          %v1143 = vld [vmem:[#allocation2 + $0xc8] sm:$0xff]
          %v1144 = vld [vmem:[#allocation2 + $0xd0] sm:$0xff]
          %v1145 = vld [vmem:[#allocation2 + $0xd8] sm:$0xff]
          %v1146 = vld [vmem:[#allocation2 + $0xe0] sm:$0xff]
          %v1147 = vld [vmem:[#allocation2 + $0xe8] sm:$0xff]
          %v1148 = vld [vmem:[#allocation2 + $0xf0] sm:$0xff]
          %v1149 = vld [vmem:[#allocation2 + $0xf8] sm:$0xff]
          %v1150 = vld [vmem:[#allocation2 + $0x100] sm:$0xff]
          %v1151 = vld [vmem:[#allocation2 + $0x108] sm:$0xff]
          %v1152 = vld [vmem:[#allocation2 + $0x110] sm:$0xff]
          %v1153 = vld [vmem:[#allocation2 + $0x118] sm:$0xff]
          %v1154 = vld [vmem:[#allocation2 + $0x120] sm:$0xff]
          %v1155 = vld [vmem:[#allocation2 + $0x128] sm:$0xff]
          %v1156 = vld [vmem:[#allocation2 + $0x130] sm:$0xff]
          %v1157 = vld [vmem:[#allocation2 + $0x138] sm:$0xff]
          %v1158 = vld [vmem:[#allocation2 + $0x140] sm:$0xff]
          %v1159 = vld [vmem:[#allocation2 + $0x148] sm:$0xff]
          %v1160 = vld [vmem:[#allocation2 + $0x150] sm:$0xff]
          %v1161 = vld [vmem:[#allocation2 + $0x158] sm:$0xff]
          %v1162 = vld [vmem:[#allocation2 + $0x160] sm:$0xff]
          %v1163 = vld [vmem:[#allocation2 + $0x168] sm:$0xff]
          %v1164 = vld [vmem:[#allocation2 + $0x170] sm:$0xff]
          %v1165 = vld [vmem:[#allocation2 + $0x178] sm:$0xff]
          %v1166 = vld [vmem:[#allocation2 + $0x180] sm:$0xff]
          %v1167 = vld [vmem:[#allocation2 + $0x188] sm:$0xff]
          %v1168 = vld [vmem:[#allocation2 + $0x190] sm:$0xff]
          %v1169 = vld [vmem:[#allocation2 + $0x198] sm:$0xff]
          %v1170 = vld [vmem:[#allocation2 + $0x1a0] sm:$0xff]
          %v1171 = vld [vmem:[#allocation2 + $0x1a8] sm:$0xff]
          %v1172 = vld [vmem:[#allocation2 + $0x1b0] sm:$0xff]
          %v1173 = vld [vmem:[#allocation2 + $0x1b8] sm:$0xff]
          %v1174 = vld [vmem:[#allocation2 + $0x1c0] sm:$0xff]
          %v1175 = vld [vmem:[#allocation2 + $0x1c8] sm:$0xff]
          %v1176 = vld [vmem:[#allocation2 + $0x1d0] sm:$0xff]
          %v1177 = vld [vmem:[#allocation2 + $0x1d8] sm:$0xff]
          %v1178 = vld [vmem:[#allocation2 + $0x1e0] sm:$0xff]
          %v1179 = vld [vmem:[#allocation2 + $0x1e8] sm:$0xff]
          %v1180 = vld [vmem:[#allocation2 + $0x1f0] sm:$0xff]
          %v1181 = vld [vmem:[#allocation2 + $0x1f8] sm:$0xff]
          %v1182 = vld [vmem:[#allocation2 + $0x200] sm:$0xff]
          %v1183 = vld [vmem:[#allocation2 + $0x208] sm:$0xff]
          %v1184 = vld [vmem:[#allocation2 + $0x210] sm:$0xff]
          %v1185 = vld [vmem:[#allocation2 + $0x218] sm:$0xff]
          %v1186 = vld [vmem:[#allocation2 + $0x220] sm:$0xff]
          %v1187 = vld [vmem:[#allocation2 + $0x228] sm:$0xff]
          %v1188 = vld [vmem:[#allocation2 + $0x230] sm:$0xff]
          %v1189 = vld [vmem:[#allocation2 + $0x238] sm:$0xff]
          %v1190 = vld [vmem:[#allocation2 + $0x240] sm:$0xff]
          %v1191 = vld [vmem:[#allocation2 + $0x248] sm:$0xff]
          %v1192 = vld [vmem:[#allocation2 + $0x250] sm:$0xff]
          %v1193 = vld [vmem:[#allocation2 + $0x258] sm:$0xff]
          %v1194 = vld [vmem:[#allocation2 + $0x260] sm:$0xff]
          %v1195 = vld [vmem:[#allocation2 + $0x268] sm:$0xff]
          %v1196 = vld [vmem:[#allocation2 + $0x270] sm:$0xff]
          %v1197 = vld [vmem:[#allocation2 + $0x278] sm:$0xff]
          %v1198 = vld [vmem:[#allocation2 + $0x280] sm:$0xff]
          %v1199 = vld [vmem:[#allocation2 + $0x288] sm:$0xff]
          %v1200 = vld [vmem:[#allocation2 + $0x290] sm:$0xff]
          %v1201 = vld [vmem:[#allocation2 + $0x298] sm:$0xff]
          %v1202 = vld [vmem:[#allocation2 + $0x2a0] sm:$0xff]
          %v1203 = vld [vmem:[#allocation2 + $0x2a8] sm:$0xff]
          %v1204 = vld [vmem:[#allocation2 + $0x2b0] sm:$0xff]
          %v1205 = vld [vmem:[#allocation2 + $0x2b8] sm:$0xff]
          %v1206 = vld [vmem:[#allocation2 + $0x2c0] sm:$0xff]
          %v1207 = vld [vmem:[#allocation2 + $0x2c8] sm:$0xff]
          %v1208 = vld [vmem:[#allocation2 + $0x2d0] sm:$0xff]
          %v1209 = vld [vmem:[#allocation2 + $0x2d8] sm:$0xff]
          %v1210 = vld [vmem:[#allocation2 + $0x2e0] sm:$0xff]
          %v1211 = vld [vmem:[#allocation2 + $0x2e8] sm:$0xff]
          %v1212 = vld [vmem:[#allocation2 + $0x2f0] sm:$0xff]
          %v1213 = vld [vmem:[#allocation2 + $0x2f8] sm:$0xff]
          %v1214 = vld [vmem:[#allocation2 + $0x300] sm:$0xff]
          %v1215 = vld [vmem:[#allocation2 + $0x308] sm:$0xff]
          %v1216 = vld [vmem:[#allocation2 + $0x310] sm:$0xff]
          %v1217 = vld [vmem:[#allocation2 + $0x318] sm:$0xff]
          %v1218 = vld [vmem:[#allocation2 + $0x320] sm:$0xff]
          %v1219 = vld [vmem:[#allocation2 + $0x328] sm:$0xff]
          %v1220 = vld [vmem:[#allocation2 + $0x330] sm:$0xff]
          %v1221 = vld [vmem:[#allocation2 + $0x338] sm:$0xff]
          %v1222 = vld [vmem:[#allocation2 + $0x340] sm:$0xff]
          %v1223 = vld [vmem:[#allocation2 + $0x348] sm:$0xff]
          %v1224 = vld [vmem:[#allocation2 + $0x350] sm:$0xff]
          %v1225 = vld [vmem:[#allocation2 + $0x358] sm:$0xff]
          %v1226 = vld [vmem:[#allocation2 + $0x360] sm:$0xff]
          %v1227 = vld [vmem:[#allocation2 + $0x368] sm:$0xff]
          %v1228 = vld [vmem:[#allocation2 + $0x370] sm:$0xff]
          %v1229 = vld [vmem:[#allocation2 + $0x378] sm:$0xff]
          %v1230 = vld [vmem:[#allocation2 + $0x380] sm:$0xff]
          %v1231 = vld [vmem:[#allocation2 + $0x388] sm:$0xff]
          %v1232 = vld [vmem:[#allocation2 + $0x390] sm:$0xff]
          %v1233 = vld [vmem:[#allocation2 + $0x398] sm:$0xff]
          %v1234 = vld [vmem:[#allocation2 + $0x3a0] sm:$0xff]
          %v1235 = vld [vmem:[#allocation2 + $0x3a8] sm:$0xff]
          %v1236 = vld [vmem:[#allocation2 + $0x3b0] sm:$0xff]
          %v1237 = vld [vmem:[#allocation2 + $0x3b8] sm:$0xff]
          %v1238 = vld [vmem:[#allocation2 + $0x3c0] sm:$0xff]
          %v1239 = vld [vmem:[#allocation2 + $0x3c8] sm:$0xff]
          %v1240 = vld [vmem:[#allocation2 + $0x3d0] sm:$0xff]
          %v1241 = vld [vmem:[#allocation2 + $0x3d8] sm:$0xff]
          %v1242 = vld [vmem:[#allocation2 + $0x3e0] sm:$0xff]
          %v1243 = vld [vmem:[#allocation2 + $0x3e8] sm:$0xff]
          %v1244 = vld [vmem:[#allocation2 + $0x3f0] sm:$0xff]
          %v1245 = vld [vmem:[#allocation2 + $0x3f8] sm:$0xff]
          %v1246 = vld [vmem:[#allocation2 + $0x400] sm:$0xff]
          %v1247 = vld [vmem:[#allocation2 + $0x408] sm:$0xff]
          %v1248 = vld [vmem:[#allocation2 + $0x410] sm:$0xff]
          %v1249 = vld [vmem:[#allocation2 + $0x418] sm:$0xff]
          %v1250 = vld [vmem:[#allocation2 + $0x420] sm:$0xff]
          %v1251 = vld [vmem:[#allocation2 + $0x428] sm:$0xff]
          %v1252 = vld [vmem:[#allocation2 + $0x430] sm:$0xff]
          %v1253 = vld [vmem:[#allocation2 + $0x438] sm:$0xff]
          %v1254 = vld [vmem:[#allocation2 + $0x440] sm:$0xff]
          %v1255 = vld [vmem:[#allocation2 + $0x448] sm:$0xff]
          %v1256 = vld [vmem:[#allocation2 + $0x450] sm:$0xff]
          %v1257 = vld [vmem:[#allocation2 + $0x458] sm:$0xff]
          %v1258 = vld [vmem:[#allocation2 + $0x460] sm:$0xff]
          %v1259 = vld [vmem:[#allocation2 + $0x468] sm:$0xff]
          %v1260 = vld [vmem:[#allocation2 + $0x470] sm:$0xff]
          %v1261 = vld [vmem:[#allocation2 + $0x478] sm:$0xff]
          %v1262 = vstv %s216
          %vm1263 = vcmp.le.s32.totalorder %v1262, 0
          %vm1264 = vcmp.le.s32.totalorder %v1262, 1
          %vm1265 = vcmp.le.s32.totalorder %v1262, 2
          %vm1266 = vcmp.le.s32.totalorder %v1262, 3
          %vm1267 = vcmp.le.s32.totalorder %v1262, 4
          %vm1268 = vcmp.le.s32.totalorder %v1262, 5
          %vm1269 = vcmp.le.s32.totalorder %v1262, 6
          %vm1270 = vcmp.le.s32.totalorder %v1262, 7
          %vm1271 = vcmp.le.s32.totalorder %v1262, 8
          %vm1272 = vcmp.le.s32.totalorder %v1262, 9
          %vm1273 = vcmp.le.s32.totalorder %v1262, 10
          %vm1274 = vcmp.le.s32.totalorder %v1262, 11
          %vm1275 = vcmp.le.s32.totalorder %v1262, 12
          %vm1276 = vcmp.le.s32.totalorder %v1262, 13
          %vm1277 = vcmp.le.s32.totalorder %v1262, 14
          %vm1278 = vcmp.le.s32.totalorder %v1262, 15
          %vm1279 = vcmp.le.s32.totalorder %v1262, 16
          %vm1280 = vcmp.le.s32.totalorder %v1262, 17
          %vm1281 = vcmp.le.s32.totalorder %v1262, 18
          %vm1282 = vcmp.le.s32.totalorder %v1262, 19
          %vm1283 = vcmp.le.s32.totalorder %v1262, 20
          %vm1284 = vcmp.le.s32.totalorder %v1262, 21
          %vm1285 = vcmp.le.s32.totalorder %v1262, 22
          %vm1286 = vcmp.le.s32.totalorder %v1262, 23
          %v1287 = vstv %s218
          %vm1288 = vcmp.gt.s32.totalorder %v1287, 0
          %vm1289 = vcmp.gt.s32.totalorder %v1287, 1
          %vm1290 = vcmp.gt.s32.totalorder %v1287, 2
          %vm1291 = vcmp.gt.s32.totalorder %v1287, 3
          %vm1292 = vcmp.gt.s32.totalorder %v1287, 4
          %vm1293 = vcmp.gt.s32.totalorder %v1287, 5
          %vm1294 = vcmp.gt.s32.totalorder %v1287, 6
          %vm1295 = vcmp.gt.s32.totalorder %v1287, 7
          %vm1296 = vcmp.gt.s32.totalorder %v1287, 8
          %vm1297 = vcmp.gt.s32.totalorder %v1287, 9
          %vm1298 = vcmp.gt.s32.totalorder %v1287, 10
          %vm1299 = vcmp.gt.s32.totalorder %v1287, 11
          %vm1300 = vcmp.gt.s32.totalorder %v1287, 12
          %vm1301 = vcmp.gt.s32.totalorder %v1287, 13
          %vm1302 = vcmp.gt.s32.totalorder %v1287, 14
          %vm1303 = vcmp.gt.s32.totalorder %v1287, 15
          %vm1304 = vcmp.gt.s32.totalorder %v1287, 16
          %vm1305 = vcmp.gt.s32.totalorder %v1287, 17
          %vm1306 = vcmp.gt.s32.totalorder %v1287, 18
          %vm1307 = vcmp.gt.s32.totalorder %v1287, 19
          %vm1308 = vcmp.gt.s32.totalorder %v1287, 20
          %vm1309 = vcmp.gt.s32.totalorder %v1287, 21
          %vm1310 = vcmp.gt.s32.totalorder %v1287, 22
          %vm1311 = vcmp.gt.s32.totalorder %v1287, 23
          %vm1312 = vmand %vm1263, %vm1288
          %vm1313 = vmand %vm1264, %vm1289
          %vm1314 = vmand %vm1265, %vm1290
          %vm1315 = vmand %vm1266, %vm1291
          %vm1316 = vmand %vm1267, %vm1292
          %vm1317 = vmand %vm1268, %vm1293
          %vm1318 = vmand %vm1269, %vm1294
          %vm1319 = vmand %vm1270, %vm1295
          %vm1320 = vmand %vm1271, %vm1296
          %vm1321 = vmand %vm1272, %vm1297
          %vm1322 = vmand %vm1273, %vm1298
          %vm1323 = vmand %vm1274, %vm1299
          %vm1324 = vmand %vm1275, %vm1300
          %vm1325 = vmand %vm1276, %vm1301
          %vm1326 = vmand %vm1277, %vm1302
          %vm1327 = vmand %vm1278, %vm1303
          %vm1328 = vmand %vm1279, %vm1304
          %vm1329 = vmand %vm1280, %vm1305
          %vm1330 = vmand %vm1281, %vm1306
          %vm1331 = vmand %vm1282, %vm1307
          %vm1332 = vmand %vm1283, %vm1308
          %vm1333 = vmand %vm1284, %vm1309
          %vm1334 = vmand %vm1285, %vm1310
          %vm1335 = vmand %vm1286, %vm1311
          %v1336 = vsel %vm1312, 0.0, -inf
          %v1337 = vsel %vm1313, 0.0, -inf
          %v1338 = vsel %vm1314, 0.0, -inf
          %v1339 = vsel %vm1315, 0.0, -inf
          %v1340 = vsel %vm1316, 0.0, -inf
          %v1341 = vsel %vm1317, 0.0, -inf
          %v1342 = vsel %vm1318, 0.0, -inf
          %v1343 = vsel %vm1319, 0.0, -inf
          %v1344 = vsel %vm1320, 0.0, -inf
          %v1345 = vsel %vm1321, 0.0, -inf
          %v1346 = vsel %vm1322, 0.0, -inf
          %v1347 = vsel %vm1323, 0.0, -inf
          %v1348 = vsel %vm1324, 0.0, -inf
          %v1349 = vsel %vm1325, 0.0, -inf
          %v1350 = vsel %vm1326, 0.0, -inf
          %v1351 = vsel %vm1327, 0.0, -inf
          %v1352 = vsel %vm1328, 0.0, -inf
          %v1353 = vsel %vm1329, 0.0, -inf
          %v1354 = vsel %vm1330, 0.0, -inf
          %v1355 = vsel %vm1331, 0.0, -inf
          %v1356 = vsel %vm1332, 0.0, -inf
          %v1357 = vsel %vm1333, 0.0, -inf
          %v1358 = vsel %vm1334, 0.0, -inf
          %v1359 = vsel %vm1335, 0.0, -inf
          %v1360 = vstv %s220
          %vm1361 = vcmp.le.s32.totalorder %v1360, 0
          %vm1362 = vcmp.le.s32.totalorder %v1360, 1
          %vm1363 = vcmp.le.s32.totalorder %v1360, 2
          %vm1364 = vcmp.le.s32.totalorder %v1360, 3
          %vm1365 = vcmp.le.s32.totalorder %v1360, 4
          %vm1366 = vcmp.le.s32.totalorder %v1360, 5
          %vm1367 = vcmp.le.s32.totalorder %v1360, 6
          %vm1368 = vcmp.le.s32.totalorder %v1360, 7
          %vm1369 = vcmp.le.s32.totalorder %v1360, 8
          %vm1370 = vcmp.le.s32.totalorder %v1360, 9
          %vm1371 = vcmp.le.s32.totalorder %v1360, 10
          %vm1372 = vcmp.le.s32.totalorder %v1360, 11
          %vm1373 = vcmp.le.s32.totalorder %v1360, 12
          %vm1374 = vcmp.le.s32.totalorder %v1360, 13
          %vm1375 = vcmp.le.s32.totalorder %v1360, 14
          %vm1376 = vcmp.le.s32.totalorder %v1360, 15
          %vm1377 = vcmp.le.s32.totalorder %v1360, 16
          %vm1378 = vcmp.le.s32.totalorder %v1360, 17
          %vm1379 = vcmp.le.s32.totalorder %v1360, 18
          %vm1380 = vcmp.le.s32.totalorder %v1360, 19
          %vm1381 = vcmp.le.s32.totalorder %v1360, 20
          %vm1382 = vcmp.le.s32.totalorder %v1360, 21
          %vm1383 = vcmp.le.s32.totalorder %v1360, 22
          %vm1384 = vcmp.le.s32.totalorder %v1360, 23
          %v1385 = vstv %s222
          %vm1386 = vcmp.gt.s32.totalorder %v1385, 0
          %vm1387 = vcmp.gt.s32.totalorder %v1385, 1
          %vm1388 = vcmp.gt.s32.totalorder %v1385, 2
          %vm1389 = vcmp.gt.s32.totalorder %v1385, 3
          %vm1390 = vcmp.gt.s32.totalorder %v1385, 4
          %vm1391 = vcmp.gt.s32.totalorder %v1385, 5
          %vm1392 = vcmp.gt.s32.totalorder %v1385, 6
          %vm1393 = vcmp.gt.s32.totalorder %v1385, 7
          %vm1394 = vcmp.gt.s32.totalorder %v1385, 8
          %vm1395 = vcmp.gt.s32.totalorder %v1385, 9
          %vm1396 = vcmp.gt.s32.totalorder %v1385, 10
          %vm1397 = vcmp.gt.s32.totalorder %v1385, 11
          %vm1398 = vcmp.gt.s32.totalorder %v1385, 12
          %vm1399 = vcmp.gt.s32.totalorder %v1385, 13
          %vm1400 = vcmp.gt.s32.totalorder %v1385, 14
          %vm1401 = vcmp.gt.s32.totalorder %v1385, 15
          %vm1402 = vcmp.gt.s32.totalorder %v1385, 16
          %vm1403 = vcmp.gt.s32.totalorder %v1385, 17
          %vm1404 = vcmp.gt.s32.totalorder %v1385, 18
          %vm1405 = vcmp.gt.s32.totalorder %v1385, 19
          %vm1406 = vcmp.gt.s32.totalorder %v1385, 20
          %vm1407 = vcmp.gt.s32.totalorder %v1385, 21
          %vm1408 = vcmp.gt.s32.totalorder %v1385, 22
          %vm1409 = vcmp.gt.s32.totalorder %v1385, 23
          %vm1410 = vmand %vm1361, %vm1386
          %vm1411 = vmand %vm1362, %vm1387
          %vm1412 = vmand %vm1363, %vm1388
          %vm1413 = vmand %vm1364, %vm1389
          %vm1414 = vmand %vm1365, %vm1390
          %vm1415 = vmand %vm1366, %vm1391
          %vm1416 = vmand %vm1367, %vm1392
          %vm1417 = vmand %vm1368, %vm1393
          %vm1418 = vmand %vm1369, %vm1394
          %vm1419 = vmand %vm1370, %vm1395
          %vm1420 = vmand %vm1371, %vm1396
          %vm1421 = vmand %vm1372, %vm1397
          %vm1422 = vmand %vm1373, %vm1398
          %vm1423 = vmand %vm1374, %vm1399
          %vm1424 = vmand %vm1375, %vm1400
          %vm1425 = vmand %vm1376, %vm1401
          %vm1426 = vmand %vm1377, %vm1402
          %vm1427 = vmand %vm1378, %vm1403
          %vm1428 = vmand %vm1379, %vm1404
          %vm1429 = vmand %vm1380, %vm1405
          %vm1430 = vmand %vm1381, %vm1406
          %vm1431 = vmand %vm1382, %vm1407
          %vm1432 = vmand %vm1383, %vm1408
          %vm1433 = vmand %vm1384, %vm1409
          %v1434 = vsel %vm1410, 0.0, -inf
          %v1435 = vsel %vm1411, 0.0, -inf
          %v1436 = vsel %vm1412, 0.0, -inf
          %v1437 = vsel %vm1413, 0.0, -inf
          %v1438 = vsel %vm1414, 0.0, -inf
          %v1439 = vsel %vm1415, 0.0, -inf
          %v1440 = vsel %vm1416, 0.0, -inf
          %v1441 = vsel %vm1417, 0.0, -inf
          %v1442 = vsel %vm1418, 0.0, -inf
          %v1443 = vsel %vm1419, 0.0, -inf
          %v1444 = vsel %vm1420, 0.0, -inf
          %v1445 = vsel %vm1421, 0.0, -inf
          %v1446 = vsel %vm1422, 0.0, -inf
          %v1447 = vsel %vm1423, 0.0, -inf
          %v1448 = vsel %vm1424, 0.0, -inf
          %v1449 = vsel %vm1425, 0.0, -inf
          %v1450 = vsel %vm1426, 0.0, -inf
          %v1451 = vsel %vm1427, 0.0, -inf
          %v1452 = vsel %vm1428, 0.0, -inf
          %v1453 = vsel %vm1429, 0.0, -inf
          %v1454 = vsel %vm1430, 0.0, -inf
          %v1455 = vsel %vm1431, 0.0, -inf
          %v1456 = vsel %vm1432, 0.0, -inf
          %v1457 = vsel %vm1433, 0.0, -inf
          %v1458 = vadd.f32 %v1118, %v1336
          %v1459 = vadd.f32 %v1119, %v1336
          %v1460 = vadd.f32 %v1120, %v1336
          %v1461 = vadd.f32 %v1121, %v1337
          %v1462 = vadd.f32 %v1122, %v1337
          %v1463 = vadd.f32 %v1123, %v1337
          %v1464 = vadd.f32 %v1124, %v1338
          %v1465 = vadd.f32 %v1125, %v1338
          %v1466 = vadd.f32 %v1126, %v1338
          %v1467 = vadd.f32 %v1127, %v1339
          %v1468 = vadd.f32 %v1128, %v1339
          %v1469 = vadd.f32 %v1129, %v1339
          %v1470 = vadd.f32 %v1130, %v1340
          %v1471 = vadd.f32 %v1131, %v1340
          %v1472 = vadd.f32 %v1132, %v1340
          %v1473 = vadd.f32 %v1133, %v1341
          %v1474 = vadd.f32 %v1134, %v1341
          %v1475 = vadd.f32 %v1135, %v1341
          %v1476 = vadd.f32 %v1136, %v1342
          %v1477 = vadd.f32 %v1137, %v1342
          %v1478 = vadd.f32 %v1138, %v1342
          %v1479 = vadd.f32 %v1139, %v1343
          %v1480 = vadd.f32 %v1140, %v1343
          %v1481 = vadd.f32 %v1141, %v1343
          %v1482 = vadd.f32 %v1142, %v1344
          %v1483 = vadd.f32 %v1143, %v1344
          %v1484 = vadd.f32 %v1144, %v1344
          %v1485 = vadd.f32 %v1145, %v1345
          %v1486 = vadd.f32 %v1146, %v1345
          %v1487 = vadd.f32 %v1147, %v1345
          %v1488 = vadd.f32 %v1148, %v1346
          %v1489 = vadd.f32 %v1149, %v1346
          %v1490 = vadd.f32 %v1150, %v1346
          %v1491 = vadd.f32 %v1151, %v1347
          %v1492 = vadd.f32 %v1152, %v1347
          %v1493 = vadd.f32 %v1153, %v1347
          %v1494 = vadd.f32 %v1154, %v1348
          %v1495 = vadd.f32 %v1155, %v1348
          %v1496 = vadd.f32 %v1156, %v1348
          %v1497 = vadd.f32 %v1157, %v1349
          %v1498 = vadd.f32 %v1158, %v1349
          %v1499 = vadd.f32 %v1159, %v1349
          %v1500 = vadd.f32 %v1160, %v1350
          %v1501 = vadd.f32 %v1161, %v1350
          %v1502 = vadd.f32 %v1162, %v1350
          %v1503 = vadd.f32 %v1163, %v1351
          %v1504 = vadd.f32 %v1164, %v1351
          %v1505 = vadd.f32 %v1165, %v1351
          %v1506 = vadd.f32 %v1166, %v1352
          %v1507 = vadd.f32 %v1167, %v1352
          %v1508 = vadd.f32 %v1168, %v1352
          %v1509 = vadd.f32 %v1169, %v1353
          %v1510 = vadd.f32 %v1170, %v1353
          %v1511 = vadd.f32 %v1171, %v1353
          %v1512 = vadd.f32 %v1172, %v1354
          %v1513 = vadd.f32 %v1173, %v1354
          %v1514 = vadd.f32 %v1174, %v1354
          %v1515 = vadd.f32 %v1175, %v1355
          %v1516 = vadd.f32 %v1176, %v1355
          %v1517 = vadd.f32 %v1177, %v1355
          %v1518 = vadd.f32 %v1178, %v1356
          %v1519 = vadd.f32 %v1179, %v1356
          %v1520 = vadd.f32 %v1180, %v1356
          %v1521 = vadd.f32 %v1181, %v1357
          %v1522 = vadd.f32 %v1182, %v1357
          %v1523 = vadd.f32 %v1183, %v1357
          %v1524 = vadd.f32 %v1184, %v1358
          %v1525 = vadd.f32 %v1185, %v1358
          %v1526 = vadd.f32 %v1186, %v1358
          %v1527 = vadd.f32 %v1187, %v1359
          %v1528 = vadd.f32 %v1188, %v1359
          %v1529 = vadd.f32 %v1189, %v1359
          %v1530 = vadd.f32 %v1190, %v1336
          %v1531 = vadd.f32 %v1191, %v1336
          %v1532 = vadd.f32 %v1192, %v1336
          %v1533 = vadd.f32 %v1193, %v1337
          %v1534 = vadd.f32 %v1194, %v1337
          %v1535 = vadd.f32 %v1195, %v1337
          %v1536 = vadd.f32 %v1196, %v1338
          %v1537 = vadd.f32 %v1197, %v1338
          %v1538 = vadd.f32 %v1198, %v1338
          %v1539 = vadd.f32 %v1199, %v1339
          %v1540 = vadd.f32 %v1200, %v1339
          %v1541 = vadd.f32 %v1201, %v1339
          %v1542 = vadd.f32 %v1202, %v1340
          %v1543 = vadd.f32 %v1203, %v1340
          %v1544 = vadd.f32 %v1204, %v1340
          %v1545 = vadd.f32 %v1205, %v1341
          %v1546 = vadd.f32 %v1206, %v1341
          %v1547 = vadd.f32 %v1207, %v1341
          %v1548 = vadd.f32 %v1208, %v1342
          %v1549 = vadd.f32 %v1209, %v1342
          %v1550 = vadd.f32 %v1210, %v1342
          %v1551 = vadd.f32 %v1211, %v1343
          %v1552 = vadd.f32 %v1212, %v1343
          %v1553 = vadd.f32 %v1213, %v1343
          %v1554 = vadd.f32 %v1214, %v1344
          %v1555 = vadd.f32 %v1215, %v1344
          %v1556 = vadd.f32 %v1216, %v1344
          %v1557 = vadd.f32 %v1217, %v1345
          %v1558 = vadd.f32 %v1218, %v1345
          %v1559 = vadd.f32 %v1219, %v1345
          %v1560 = vadd.f32 %v1220, %v1346
          %v1561 = vadd.f32 %v1221, %v1346
          %v1562 = vadd.f32 %v1222, %v1346
          %v1563 = vadd.f32 %v1223, %v1347
          %v1564 = vadd.f32 %v1224, %v1347
          %v1565 = vadd.f32 %v1225, %v1347
          %v1566 = vadd.f32 %v1226, %v1348
          %v1567 = vadd.f32 %v1227, %v1348
          %v1568 = vadd.f32 %v1228, %v1348
          %v1569 = vadd.f32 %v1229, %v1349
          %v1570 = vadd.f32 %v1230, %v1349
          %v1571 = vadd.f32 %v1231, %v1349
          %v1572 = vadd.f32 %v1232, %v1350
          %v1573 = vadd.f32 %v1233, %v1350
          %v1574 = vadd.f32 %v1234, %v1350
          %v1575 = vadd.f32 %v1235, %v1351
          %v1576 = vadd.f32 %v1236, %v1351
          %v1577 = vadd.f32 %v1237, %v1351
          %v1578 = vadd.f32 %v1238, %v1352
          %v1579 = vadd.f32 %v1239, %v1352
          %v1580 = vadd.f32 %v1240, %v1352
          %v1581 = vadd.f32 %v1241, %v1353
          %v1582 = vadd.f32 %v1242, %v1353
          %v1583 = vadd.f32 %v1243, %v1353
          %v1584 = vadd.f32 %v1244, %v1354
          %v1585 = vadd.f32 %v1245, %v1354
          %v1586 = vadd.f32 %v1246, %v1354
          %v1587 = vadd.f32 %v1247, %v1355
          %v1588 = vadd.f32 %v1248, %v1355
          %v1589 = vadd.f32 %v1249, %v1355
          %v1590 = vadd.f32 %v1250, %v1356
          %v1591 = vadd.f32 %v1251, %v1356
          %v1592 = vadd.f32 %v1252, %v1356
          %v1593 = vadd.f32 %v1253, %v1357
          %v1594 = vadd.f32 %v1254, %v1357
          %v1595 = vadd.f32 %v1255, %v1357
          %v1596 = vadd.f32 %v1256, %v1358
          %v1597 = vadd.f32 %v1257, %v1358
          %v1598 = vadd.f32 %v1258, %v1358
          %v1599 = vadd.f32 %v1259, %v1359
          %v1600 = vadd.f32 %v1260, %v1359
          %v1601 = vadd.f32 %v1261, %v1359
          %v1602 = vmax.f32 %v1458, %v1461
          %v1603 = vmax.f32 %v1602, %v1464
          %v1604 = vmax.f32 %v1603, %v1467
          %v1605 = vmax.f32 %v1604, %v1470
          %v1606 = vmax.f32 %v1605, %v1473
          %v1607 = vmax.f32 %v1606, %v1476
          %v1608 = vmax.f32 %v1607, %v1479
          %v1609 = vmax.f32 %v1608, %v1482
          %v1610 = vmax.f32 %v1609, %v1485
          %v1611 = vmax.f32 %v1610, %v1488
          %v1612 = vmax.f32 %v1611, %v1491
          %v1613 = vmax.f32 %v1612, %v1494
          %v1614 = vmax.f32 %v1613, %v1497
          %v1615 = vmax.f32 %v1614, %v1500
          %v1616 = vmax.f32 %v1615, %v1503
          %v1617 = vmax.f32 %v1616, %v1506
          %v1618 = vmax.f32 %v1617, %v1509
          %v1619 = vmax.f32 %v1618, %v1512
          %v1620 = vmax.f32 %v1619, %v1515
          %v1621 = vmax.f32 %v1620, %v1518
          %v1622 = vmax.f32 %v1621, %v1521
          %v1623 = vmax.f32 %v1622, %v1524
          %v1624 = vmax.f32 %v1623, %v1527
          %v1625 = vmax.f32 %v1459, %v1462
          %v1626 = vmax.f32 %v1625, %v1465
          %v1627 = vmax.f32 %v1626, %v1468
          %v1628 = vmax.f32 %v1627, %v1471
          %v1629 = vmax.f32 %v1628, %v1474
          %v1630 = vmax.f32 %v1629, %v1477
          %v1631 = vmax.f32 %v1630, %v1480
          %v1632 = vmax.f32 %v1631, %v1483
          %v1633 = vmax.f32 %v1632, %v1486
          %v1634 = vmax.f32 %v1633, %v1489
          %v1635 = vmax.f32 %v1634, %v1492
          %v1636 = vmax.f32 %v1635, %v1495
          %v1637 = vmax.f32 %v1636, %v1498
          %v1638 = vmax.f32 %v1637, %v1501
          %v1639 = vmax.f32 %v1638, %v1504
          %v1640 = vmax.f32 %v1639, %v1507
          %v1641 = vmax.f32 %v1640, %v1510
          %v1642 = vmax.f32 %v1641, %v1513
          %v1643 = vmax.f32 %v1642, %v1516
          %v1644 = vmax.f32 %v1643, %v1519
          %v1645 = vmax.f32 %v1644, %v1522
          %v1646 = vmax.f32 %v1645, %v1525
          %v1647 = vmax.f32 %v1646, %v1528
          %v1648 = vmax.f32 %v1460, %v1463
          %v1649 = vmax.f32 %v1648, %v1466
          %v1650 = vmax.f32 %v1649, %v1469
          %v1651 = vmax.f32 %v1650, %v1472
          %v1652 = vmax.f32 %v1651, %v1475
          %v1653 = vmax.f32 %v1652, %v1478
          %v1654 = vmax.f32 %v1653, %v1481
          %v1655 = vmax.f32 %v1654, %v1484
          %v1656 = vmax.f32 %v1655, %v1487
          %v1657 = vmax.f32 %v1656, %v1490
          %v1658 = vmax.f32 %v1657, %v1493
          %v1659 = vmax.f32 %v1658, %v1496
          %v1660 = vmax.f32 %v1659, %v1499
          %v1661 = vmax.f32 %v1660, %v1502
          %v1662 = vmax.f32 %v1661, %v1505
          %v1663 = vmax.f32 %v1662, %v1508
          %v1664 = vmax.f32 %v1663, %v1511
          %v1665 = vmax.f32 %v1664, %v1514
          %v1666 = vmax.f32 %v1665, %v1517
          %v1667 = vmax.f32 %v1666, %v1520
          %v1668 = vmax.f32 %v1667, %v1523
          %v1669 = vmax.f32 %v1668, %v1526
          %v1670 = vmax.f32 %v1669, %v1529
          %v1671 = vmax.f32 %v1530, %v1533
          %v1672 = vmax.f32 %v1671, %v1536
          %v1673 = vmax.f32 %v1672, %v1539
          %v1674 = vmax.f32 %v1673, %v1542
          %v1675 = vmax.f32 %v1674, %v1545
          %v1676 = vmax.f32 %v1675, %v1548
          %v1677 = vmax.f32 %v1676, %v1551
          %v1678 = vmax.f32 %v1677, %v1554
          %v1679 = vmax.f32 %v1678, %v1557
          %v1680 = vmax.f32 %v1679, %v1560
          %v1681 = vmax.f32 %v1680, %v1563
          %v1682 = vmax.f32 %v1681, %v1566
          %v1683 = vmax.f32 %v1682, %v1569
          %v1684 = vmax.f32 %v1683, %v1572
          %v1685 = vmax.f32 %v1684, %v1575
          %v1686 = vmax.f32 %v1685, %v1578
          %v1687 = vmax.f32 %v1686, %v1581
          %v1688 = vmax.f32 %v1687, %v1584
          %v1689 = vmax.f32 %v1688, %v1587
          %v1690 = vmax.f32 %v1689, %v1590
          %v1691 = vmax.f32 %v1690, %v1593
          %v1692 = vmax.f32 %v1691, %v1596
          %v1693 = vmax.f32 %v1692, %v1599
          %v1694 = vmax.f32 %v1531, %v1534
          %v1695 = vmax.f32 %v1694, %v1537
          %v1696 = vmax.f32 %v1695, %v1540
          %v1697 = vmax.f32 %v1696, %v1543
          %v1698 = vmax.f32 %v1697, %v1546
          %v1699 = vmax.f32 %v1698, %v1549
          %v1700 = vmax.f32 %v1699, %v1552
          %v1701 = vmax.f32 %v1700, %v1555
          %v1702 = vmax.f32 %v1701, %v1558
          %v1703 = vmax.f32 %v1702, %v1561
          %v1704 = vmax.f32 %v1703, %v1564
          %v1705 = vmax.f32 %v1704, %v1567
          %v1706 = vmax.f32 %v1705, %v1570
          %v1707 = vmax.f32 %v1706, %v1573
          %v1708 = vmax.f32 %v1707, %v1576
          %v1709 = vmax.f32 %v1708, %v1579
          %v1710 = vmax.f32 %v1709, %v1582
          %v1711 = vmax.f32 %v1710, %v1585
          %v1712 = vmax.f32 %v1711, %v1588
          %v1713 = vmax.f32 %v1712, %v1591
          %v1714 = vmax.f32 %v1713, %v1594
          %v1715 = vmax.f32 %v1714, %v1597
          %v1716 = vmax.f32 %v1715, %v1600
          %v1717 = vmax.f32 %v1532, %v1535
          %v1718 = vmax.f32 %v1717, %v1538
          %v1719 = vmax.f32 %v1718, %v1541
          %v1720 = vmax.f32 %v1719, %v1544
          %v1721 = vmax.f32 %v1720, %v1547
          %v1722 = vmax.f32 %v1721, %v1550
          %v1723 = vmax.f32 %v1722, %v1553
          %v1724 = vmax.f32 %v1723, %v1556
          %v1725 = vmax.f32 %v1724, %v1559
          %v1726 = vmax.f32 %v1725, %v1562
          %v1727 = vmax.f32 %v1726, %v1565
          %v1728 = vmax.f32 %v1727, %v1568
          %v1729 = vmax.f32 %v1728, %v1571
          %v1730 = vmax.f32 %v1729, %v1574
          %v1731 = vmax.f32 %v1730, %v1577
          %v1732 = vmax.f32 %v1731, %v1580
          %v1733 = vmax.f32 %v1732, %v1583
          %v1734 = vmax.f32 %v1733, %v1586
          %v1735 = vmax.f32 %v1734, %v1589
          %v1736 = vmax.f32 %v1735, %v1592
          %v1737 = vmax.f32 %v1736, %v1595
          %v1738 = vmax.f32 %v1737, %v1598
          %v1739 = vmax.f32 %v1738, %v1601
          %v1740 = vadd.f32 %v1118, %v1434
          %v1741 = vadd.f32 %v1119, %v1434
          %v1742 = vadd.f32 %v1120, %v1434
          %v1743 = vadd.f32 %v1121, %v1435
          %v1744 = vadd.f32 %v1122, %v1435
          %v1745 = vadd.f32 %v1123, %v1435
          %v1746 = vadd.f32 %v1124, %v1436
          %v1747 = vadd.f32 %v1125, %v1436
          %v1748 = vadd.f32 %v1126, %v1436
          %v1749 = vadd.f32 %v1127, %v1437
          %v1750 = vadd.f32 %v1128, %v1437
          %v1751 = vadd.f32 %v1129, %v1437
          %v1752 = vadd.f32 %v1130, %v1438
          %v1753 = vadd.f32 %v1131, %v1438
          %v1754 = vadd.f32 %v1132, %v1438
          %v1755 = vadd.f32 %v1133, %v1439
          %v1756 = vadd.f32 %v1134, %v1439
          %v1757 = vadd.f32 %v1135, %v1439
          %v1758 = vadd.f32 %v1136, %v1440
          %v1759 = vadd.f32 %v1137, %v1440
          %v1760 = vadd.f32 %v1138, %v1440
          %v1761 = vadd.f32 %v1139, %v1441
          %v1762 = vadd.f32 %v1140, %v1441
          %v1763 = vadd.f32 %v1141, %v1441
          %v1764 = vadd.f32 %v1142, %v1442
          %v1765 = vadd.f32 %v1143, %v1442
          %v1766 = vadd.f32 %v1144, %v1442
          %v1767 = vadd.f32 %v1145, %v1443
          %v1768 = vadd.f32 %v1146, %v1443
          %v1769 = vadd.f32 %v1147, %v1443
          %v1770 = vadd.f32 %v1148, %v1444
          %v1771 = vadd.f32 %v1149, %v1444
          %v1772 = vadd.f32 %v1150, %v1444
          %v1773 = vadd.f32 %v1151, %v1445
          %v1774 = vadd.f32 %v1152, %v1445
          %v1775 = vadd.f32 %v1153, %v1445
          %v1776 = vadd.f32 %v1154, %v1446
          %v1777 = vadd.f32 %v1155, %v1446
          %v1778 = vadd.f32 %v1156, %v1446
          %v1779 = vadd.f32 %v1157, %v1447
          %v1780 = vadd.f32 %v1158, %v1447
          %v1781 = vadd.f32 %v1159, %v1447
          %v1782 = vadd.f32 %v1160, %v1448
          %v1783 = vadd.f32 %v1161, %v1448
          %v1784 = vadd.f32 %v1162, %v1448
          %v1785 = vadd.f32 %v1163, %v1449
          %v1786 = vadd.f32 %v1164, %v1449
          %v1787 = vadd.f32 %v1165, %v1449
          %v1788 = vadd.f32 %v1166, %v1450
          %v1789 = vadd.f32 %v1167, %v1450
          %v1790 = vadd.f32 %v1168, %v1450
          %v1791 = vadd.f32 %v1169, %v1451
          %v1792 = vadd.f32 %v1170, %v1451
          %v1793 = vadd.f32 %v1171, %v1451
          %v1794 = vadd.f32 %v1172, %v1452
          %v1795 = vadd.f32 %v1173, %v1452
          %v1796 = vadd.f32 %v1174, %v1452
          %v1797 = vadd.f32 %v1175, %v1453
          %v1798 = vadd.f32 %v1176, %v1453
          %v1799 = vadd.f32 %v1177, %v1453
          %v1800 = vadd.f32 %v1178, %v1454
          %v1801 = vadd.f32 %v1179, %v1454
          %v1802 = vadd.f32 %v1180, %v1454
          %v1803 = vadd.f32 %v1181, %v1455
          %v1804 = vadd.f32 %v1182, %v1455
          %v1805 = vadd.f32 %v1183, %v1455
          %v1806 = vadd.f32 %v1184, %v1456
          %v1807 = vadd.f32 %v1185, %v1456
          %v1808 = vadd.f32 %v1186, %v1456
          %v1809 = vadd.f32 %v1187, %v1457
          %v1810 = vadd.f32 %v1188, %v1457
          %v1811 = vadd.f32 %v1189, %v1457
          %v1812 = vadd.f32 %v1190, %v1434
          %v1813 = vadd.f32 %v1191, %v1434
          %v1814 = vadd.f32 %v1192, %v1434
          %v1815 = vadd.f32 %v1193, %v1435
          %v1816 = vadd.f32 %v1194, %v1435
          %v1817 = vadd.f32 %v1195, %v1435
          %v1818 = vadd.f32 %v1196, %v1436
          %v1819 = vadd.f32 %v1197, %v1436
          %v1820 = vadd.f32 %v1198, %v1436
          %v1821 = vadd.f32 %v1199, %v1437
          %v1822 = vadd.f32 %v1200, %v1437
          %v1823 = vadd.f32 %v1201, %v1437
          %v1824 = vadd.f32 %v1202, %v1438
          %v1825 = vadd.f32 %v1203, %v1438
          %v1826 = vadd.f32 %v1204, %v1438
          %v1827 = vadd.f32 %v1205, %v1439
          %v1828 = vadd.f32 %v1206, %v1439
          %v1829 = vadd.f32 %v1207, %v1439
          %v1830 = vadd.f32 %v1208, %v1440
          %v1831 = vadd.f32 %v1209, %v1440
          %v1832 = vadd.f32 %v1210, %v1440
          %v1833 = vadd.f32 %v1211, %v1441
          %v1834 = vadd.f32 %v1212, %v1441
          %v1835 = vadd.f32 %v1213, %v1441
          %v1836 = vadd.f32 %v1214, %v1442
          %v1837 = vadd.f32 %v1215, %v1442
          %v1838 = vadd.f32 %v1216, %v1442
          %v1839 = vadd.f32 %v1217, %v1443
          %v1840 = vadd.f32 %v1218, %v1443
          %v1841 = vadd.f32 %v1219, %v1443
          %v1842 = vadd.f32 %v1220, %v1444
          %v1843 = vadd.f32 %v1221, %v1444
          %v1844 = vadd.f32 %v1222, %v1444
          %v1845 = vadd.f32 %v1223, %v1445
          %v1846 = vadd.f32 %v1224, %v1445
          %v1847 = vadd.f32 %v1225, %v1445
          %v1848 = vadd.f32 %v1226, %v1446
          %v1849 = vadd.f32 %v1227, %v1446
          %v1850 = vadd.f32 %v1228, %v1446
          %v1851 = vadd.f32 %v1229, %v1447
          %v1852 = vadd.f32 %v1230, %v1447
          %v1853 = vadd.f32 %v1231, %v1447
          %v1854 = vadd.f32 %v1232, %v1448
          %v1855 = vadd.f32 %v1233, %v1448
          %v1856 = vadd.f32 %v1234, %v1448
          %v1857 = vadd.f32 %v1235, %v1449
          %v1858 = vadd.f32 %v1236, %v1449
          %v1859 = vadd.f32 %v1237, %v1449
          %v1860 = vadd.f32 %v1238, %v1450
          %v1861 = vadd.f32 %v1239, %v1450
          %v1862 = vadd.f32 %v1240, %v1450
          %v1863 = vadd.f32 %v1241, %v1451
          %v1864 = vadd.f32 %v1242, %v1451
          %v1865 = vadd.f32 %v1243, %v1451
          %v1866 = vadd.f32 %v1244, %v1452
          %v1867 = vadd.f32 %v1245, %v1452
          %v1868 = vadd.f32 %v1246, %v1452
          %v1869 = vadd.f32 %v1247, %v1453
          %v1870 = vadd.f32 %v1248, %v1453
          %v1871 = vadd.f32 %v1249, %v1453
          %v1872 = vadd.f32 %v1250, %v1454
          %v1873 = vadd.f32 %v1251, %v1454
          %v1874 = vadd.f32 %v1252, %v1454
          %v1875 = vadd.f32 %v1253, %v1455
          %v1876 = vadd.f32 %v1254, %v1455
          %v1877 = vadd.f32 %v1255, %v1455
          %v1878 = vadd.f32 %v1256, %v1456
          %v1879 = vadd.f32 %v1257, %v1456
          %v1880 = vadd.f32 %v1258, %v1456
          %v1881 = vadd.f32 %v1259, %v1457
          %v1882 = vadd.f32 %v1260, %v1457
          %v1883 = vadd.f32 %v1261, %v1457
          %v1884 = vmax.f32 %v1740, %v1743
          %v1885 = vmax.f32 %v1884, %v1746
          %v1886 = vmax.f32 %v1885, %v1749
          %v1887 = vmax.f32 %v1886, %v1752
          %v1888 = vmax.f32 %v1887, %v1755
          %v1889 = vmax.f32 %v1888, %v1758
          %v1890 = vmax.f32 %v1889, %v1761
          %v1891 = vmax.f32 %v1890, %v1764
          %v1892 = vmax.f32 %v1891, %v1767
          %v1893 = vmax.f32 %v1892, %v1770
          %v1894 = vmax.f32 %v1893, %v1773
          %v1895 = vmax.f32 %v1894, %v1776
          %v1896 = vmax.f32 %v1895, %v1779
          %v1897 = vmax.f32 %v1896, %v1782
          %v1898 = vmax.f32 %v1897, %v1785
          %v1899 = vmax.f32 %v1898, %v1788
          %v1900 = vmax.f32 %v1899, %v1791
          %v1901 = vmax.f32 %v1900, %v1794
          %v1902 = vmax.f32 %v1901, %v1797
          %v1903 = vmax.f32 %v1902, %v1800
          %v1904 = vmax.f32 %v1903, %v1803
          %v1905 = vmax.f32 %v1904, %v1806
          %v1906 = vmax.f32 %v1905, %v1809
          %v1907 = vmax.f32 %v1741, %v1744
          %v1908 = vmax.f32 %v1907, %v1747
          %v1909 = vmax.f32 %v1908, %v1750
          %v1910 = vmax.f32 %v1909, %v1753
          %v1911 = vmax.f32 %v1910, %v1756
          %v1912 = vmax.f32 %v1911, %v1759
          %v1913 = vmax.f32 %v1912, %v1762
          %v1914 = vmax.f32 %v1913, %v1765
          %v1915 = vmax.f32 %v1914, %v1768
          %v1916 = vmax.f32 %v1915, %v1771
          %v1917 = vmax.f32 %v1916, %v1774
          %v1918 = vmax.f32 %v1917, %v1777
          %v1919 = vmax.f32 %v1918, %v1780
          %v1920 = vmax.f32 %v1919, %v1783
          %v1921 = vmax.f32 %v1920, %v1786
          %v1922 = vmax.f32 %v1921, %v1789
          %v1923 = vmax.f32 %v1922, %v1792
          %v1924 = vmax.f32 %v1923, %v1795
          %v1925 = vmax.f32 %v1924, %v1798
          %v1926 = vmax.f32 %v1925, %v1801
          %v1927 = vmax.f32 %v1926, %v1804
          %v1928 = vmax.f32 %v1927, %v1807
          %v1929 = vmax.f32 %v1928, %v1810
          %v1930 = vmax.f32 %v1742, %v1745
          %v1931 = vmax.f32 %v1930, %v1748
          %v1932 = vmax.f32 %v1931, %v1751
          %v1933 = vmax.f32 %v1932, %v1754
          %v1934 = vmax.f32 %v1933, %v1757
          %v1935 = vmax.f32 %v1934, %v1760
          %v1936 = vmax.f32 %v1935, %v1763
          %v1937 = vmax.f32 %v1936, %v1766
          %v1938 = vmax.f32 %v1937, %v1769
          %v1939 = vmax.f32 %v1938, %v1772
          %v1940 = vmax.f32 %v1939, %v1775
          %v1941 = vmax.f32 %v1940, %v1778
          %v1942 = vmax.f32 %v1941, %v1781
          %v1943 = vmax.f32 %v1942, %v1784
          %v1944 = vmax.f32 %v1943, %v1787
          %v1945 = vmax.f32 %v1944, %v1790
          %v1946 = vmax.f32 %v1945, %v1793
          %v1947 = vmax.f32 %v1946, %v1796
          %v1948 = vmax.f32 %v1947, %v1799
          %v1949 = vmax.f32 %v1948, %v1802
          %v1950 = vmax.f32 %v1949, %v1805
          %v1951 = vmax.f32 %v1950, %v1808
          %v1952 = vmax.f32 %v1951, %v1811
          %v1953 = vmax.f32 %v1812, %v1815
          %v1954 = vmax.f32 %v1953, %v1818
          %v1955 = vmax.f32 %v1954, %v1821
          %v1956 = vmax.f32 %v1955, %v1824
          %v1957 = vmax.f32 %v1956, %v1827
          %v1958 = vmax.f32 %v1957, %v1830
          %v1959 = vmax.f32 %v1958, %v1833
          %v1960 = vmax.f32 %v1959, %v1836
          %v1961 = vmax.f32 %v1960, %v1839
          %v1962 = vmax.f32 %v1961, %v1842
          %v1963 = vmax.f32 %v1962, %v1845
          %v1964 = vmax.f32 %v1963, %v1848
          %v1965 = vmax.f32 %v1964, %v1851
          %v1966 = vmax.f32 %v1965, %v1854
          %v1967 = vmax.f32 %v1966, %v1857
          %v1968 = vmax.f32 %v1967, %v1860
          %v1969 = vmax.f32 %v1968, %v1863
          %v1970 = vmax.f32 %v1969, %v1866
          %v1971 = vmax.f32 %v1970, %v1869
          %v1972 = vmax.f32 %v1971, %v1872
          %v1973 = vmax.f32 %v1972, %v1875
          %v1974 = vmax.f32 %v1973, %v1878
          %v1975 = vmax.f32 %v1974, %v1881
          %v1976 = vmax.f32 %v1813, %v1816
          %v1977 = vmax.f32 %v1976, %v1819
          %v1978 = vmax.f32 %v1977, %v1822
          %v1979 = vmax.f32 %v1978, %v1825
          %v1980 = vmax.f32 %v1979, %v1828
          %v1981 = vmax.f32 %v1980, %v1831
          %v1982 = vmax.f32 %v1981, %v1834
          %v1983 = vmax.f32 %v1982, %v1837
          %v1984 = vmax.f32 %v1983, %v1840
          %v1985 = vmax.f32 %v1984, %v1843
          %v1986 = vmax.f32 %v1985, %v1846
          %v1987 = vmax.f32 %v1986, %v1849
          %v1988 = vmax.f32 %v1987, %v1852
          %v1989 = vmax.f32 %v1988, %v1855
          %v1990 = vmax.f32 %v1989, %v1858
          %v1991 = vmax.f32 %v1990, %v1861
          %v1992 = vmax.f32 %v1991, %v1864
          %v1993 = vmax.f32 %v1992, %v1867
          %v1994 = vmax.f32 %v1993, %v1870
          %v1995 = vmax.f32 %v1994, %v1873
          %v1996 = vmax.f32 %v1995, %v1876
          %v1997 = vmax.f32 %v1996, %v1879
          %v1998 = vmax.f32 %v1997, %v1882
          %v1999 = vmax.f32 %v1814, %v1817
          %v2000 = vmax.f32 %v1999, %v1820
          %v2001 = vmax.f32 %v2000, %v1823
          %v2002 = vmax.f32 %v2001, %v1826
          %v2003 = vmax.f32 %v2002, %v1829
          %v2004 = vmax.f32 %v2003, %v1832
          %v2005 = vmax.f32 %v2004, %v1835
          %v2006 = vmax.f32 %v2005, %v1838
          %v2007 = vmax.f32 %v2006, %v1841
          %v2008 = vmax.f32 %v2007, %v1844
          %v2009 = vmax.f32 %v2008, %v1847
          %v2010 = vmax.f32 %v2009, %v1850
          %v2011 = vmax.f32 %v2010, %v1853
          %v2012 = vmax.f32 %v2011, %v1856
          %v2013 = vmax.f32 %v2012, %v1859
          %v2014 = vmax.f32 %v2013, %v1862
          %v2015 = vmax.f32 %v2014, %v1865
          %v2016 = vmax.f32 %v2015, %v1868
          %v2017 = vmax.f32 %v2016, %v1871
          %v2018 = vmax.f32 %v2017, %v1874
          %v2019 = vmax.f32 %v2018, %v1877
          %v2020 = vmax.f32 %v2019, %v1880
          %v2021 = vmax.f32 %v2020, %v1883
          %v2022 = vstv %s224
          %vm2023 = vcmp.ge.s32.totalorder %v194, %v2022
          %vm2024 = vcmp.ge.s32.totalorder %v195, %v2022
          %vm2025 = vcmp.ge.s32.totalorder %v196, %v2022
          %v2026 = vstv %s226
          %vm2027 = vcmp.lt.s32.totalorder %v194, %v2026
          %vm2028 = vcmp.lt.s32.totalorder %v195, %v2026
          %vm2029 = vcmp.lt.s32.totalorder %v196, %v2026
          %vm2030 = vmand %vm2023, %vm2027
          %vm2031 = vmand %vm2024, %vm2028
          %vm2032 = vmand %vm2025, %vm2029
          %v2033 = vsel %vm2030, 0.0, -inf
          %v2034 = vsel %vm2031, 0.0, -inf
          %v2035 = vsel %vm2032, 0.0, -inf
          %v2036 = vstv %s228
          %vm2037 = vcmp.ge.s32.totalorder %v194, %v2036
          %vm2038 = vcmp.ge.s32.totalorder %v195, %v2036
          %vm2039 = vcmp.ge.s32.totalorder %v196, %v2036
          %v2040 = vstv %s230
          %vm2041 = vcmp.lt.s32.totalorder %v194, %v2040
          %vm2042 = vcmp.lt.s32.totalorder %v195, %v2040
          %vm2043 = vcmp.lt.s32.totalorder %v196, %v2040
          %vm2044 = vmand %vm2037, %vm2041
          %vm2045 = vmand %vm2038, %vm2042
          %vm2046 = vmand %vm2039, %vm2043
          %v2047 = vsel %vm2044, 0.0, -inf
          %v2048 = vsel %vm2045, 0.0, -inf
          %v2049 = vsel %vm2046, 0.0, -inf
          %v2050 = vadd.f32 %v1624, %v2033
          %v2051 = vadd.f32 %v1647, %v2034
          %v2052 = vadd.f32 %v1670, %v2035
          %v2053 = vadd.f32 %v1906, %v2033
          %v2054 = vadd.f32 %v1929, %v2034
          %v2055 = vadd.f32 %v1952, %v2035
          %v2056 = vadd.f32 %v1693, %v2033
          %v2057 = vadd.f32 %v1716, %v2034
          %v2058 = vadd.f32 %v1739, %v2035
          %v2059 = vadd.f32 %v1975, %v2033
          %v2060 = vadd.f32 %v1998, %v2034
          %v2061 = vadd.f32 %v2021, %v2035
          %v2062 = vmax.f32 %v2050, %v2051
          %v2063 = vmax.f32 %v2062, %v2052
          %v2064 = vrot.slane %v2063, 4
          %v2065 = vmax.f32 %v2063, %v2064
          %v2066 = vrot.slane %v2065, 2
          %v2067 = vmax.f32 %v2065, %v2066
          %v2068 = vrot.slane %v2067, 1
          %v2069 = vmax.f32 %v2067, %v2068
          %v2070 = vmax.f32 %v2053, %v2054
          %v2071 = vmax.f32 %v2070, %v2055
          %v2072 = vrot.slane %v2071, 4
          %v2073 = vmax.f32 %v2071, %v2072
          %v2074 = vrot.slane %v2073, 2
          %v2075 = vmax.f32 %v2073, %v2074
          %v2076 = vrot.slane %v2075, 1
          %v2077 = vmax.f32 %v2075, %v2076
          %v2078 = vmax.f32 %v2056, %v2057
          %v2079 = vmax.f32 %v2078, %v2058
          %v2080 = vrot.slane %v2079, 4
          %v2081 = vmax.f32 %v2079, %v2080
          %v2082 = vrot.slane %v2081, 2
          %v2083 = vmax.f32 %v2081, %v2082
          %v2084 = vrot.slane %v2083, 1
          %v2085 = vmax.f32 %v2083, %v2084
          %v2086 = vmax.f32 %v2059, %v2060
          %v2087 = vmax.f32 %v2086, %v2061
          %v2088 = vrot.slane %v2087, 4
          %v2089 = vmax.f32 %v2087, %v2088
          %v2090 = vrot.slane %v2089, 2
          %v2091 = vmax.f32 %v2089, %v2090
          %v2092 = vrot.slane %v2091, 1
          %v2093 = vmax.f32 %v2091, %v2092
          %v2094 = vadd.f32 %v1624, %v2047
          %v2095 = vadd.f32 %v1647, %v2048
          %v2096 = vadd.f32 %v1670, %v2049
          %v2097 = vadd.f32 %v1906, %v2047
          %v2098 = vadd.f32 %v1929, %v2048
          %v2099 = vadd.f32 %v1952, %v2049
          %v2100 = vadd.f32 %v1693, %v2047
          %v2101 = vadd.f32 %v1716, %v2048
          %v2102 = vadd.f32 %v1739, %v2049
          %v2103 = vadd.f32 %v1975, %v2047
          %v2104 = vadd.f32 %v1998, %v2048
          %v2105 = vadd.f32 %v2021, %v2049
          %v2106 = vmax.f32 %v2094, %v2095
          %v2107 = vmax.f32 %v2106, %v2096
          %v2108 = vrot.slane %v2107, 4
          %v2109 = vmax.f32 %v2107, %v2108
          %v2110 = vrot.slane %v2109, 2
          %v2111 = vmax.f32 %v2109, %v2110
          %v2112 = vrot.slane %v2111, 1
          %v2113 = vmax.f32 %v2111, %v2112
          %v2114 = vmax.f32 %v2097, %v2098
          %v2115 = vmax.f32 %v2114, %v2099
          %v2116 = vrot.slane %v2115, 4
          %v2117 = vmax.f32 %v2115, %v2116
          %v2118 = vrot.slane %v2117, 2
          %v2119 = vmax.f32 %v2117, %v2118
          %v2120 = vrot.slane %v2119, 1
          %v2121 = vmax.f32 %v2119, %v2120
          %v2122 = vmax.f32 %v2100, %v2101
          %v2123 = vmax.f32 %v2122, %v2102
          %v2124 = vrot.slane %v2123, 4
          %v2125 = vmax.f32 %v2123, %v2124
          %v2126 = vrot.slane %v2125, 2
          %v2127 = vmax.f32 %v2125, %v2126
          %v2128 = vrot.slane %v2127, 1
          %v2129 = vmax.f32 %v2127, %v2128
          %v2130 = vmax.f32 %v2103, %v2104
          %v2131 = vmax.f32 %v2130, %v2105
          %v2132 = vrot.slane %v2131, 4
          %v2133 = vmax.f32 %v2131, %v2132
          %v2134 = vrot.slane %v2133, 2
          %v2135 = vmax.f32 %v2133, %v2134
          %v2136 = vrot.slane %v2135, 1
          %v2137 = vmax.f32 %v2135, %v2136
          %vm2138 = vcmask 1040384
          %v2139 = vsel %vm2138, %v2069, %v2113
          %v2140 = vsel %vm2138, %v2077, %v2121
          %v2141 = vsel %vm2138, %v2085, %v2129
          %v2142 = vsel %vm2138, %v2093, %v2137
          %2147 = vst [vmem:[#allocation1] ss:$4 sm:$0xff] %v2139
          %s2148 = scalar_lea.vmem [#allocation1], 1
          %2149 = vst [vmem:[%s2148] ss:$4 sm:$0xff] %v2140
          %s2150 = scalar_lea.vmem [#allocation1], 2
          %2151 = vst [vmem:[%s2150] ss:$4 sm:$0xff] %v2141
          %s2152 = scalar_lea.vmem [#allocation1], 3
          %2153 = vst [vmem:[%s2152] ss:$4 sm:$0xff] %v2142
          %v2154 = vld.sshfl [vmem:[#allocation1] sm:$0xff pattern:$0x73625140]
          %s2156 = smul.u32 %s198, 8
          %s2157 = scalar_lea.vmem %s191, %s2156 [#allocation8]
          %2158 = vst [vmem:[%s2157] sm:$0xff] %v2154
        $region41: #{tpu_custom_call.1} parent=27 // loop_footer
          %s202 = sadd.s32 1, %s198
        $region42: #{tpu_custom_call.1} parent=27 // loop_footer_branch
          %197 = sbr.rel target = $region38
        $region43: #{tpu_custom_call.1} parent=27 // loop_exit
          _
        %s2159 = sand.u32 %s89, 1
        %s2160 = scalar_lea.sflag [#allocation5], %s2159
        %s2161 = sand.u32 %s89, 1
        %s2162 = smul.addr %s2161, 40
        %s2163 = scalar_lea.vmem [#allocation8], %s2162
        // Predicated region
        $region58: #{tpu_custom_call.1} parent=27 // pred_check
          %p2164 = pneg %p99
        $region59: #{tpu_custom_call.1} parent=27 // pred_check_branch
          %2166 = sbr.rel (%p2164) target = $region61
        $region60: #{tpu_custom_call.1} parent=27 // pred_region
          %s2167 = smul.u32 5, %s25
          %2169 = vsyncadd %s2160, 0
          %s2170 = smul.addr %s24, 10
          %s2171 = sadd.s32 %s2167, %s2170
          %s2172 = smul.addr %s2171, 8
          %s2173 = scalar_lea.hbm %s2, %s2172
          %s2174 = sshll.u32 %s2163, 4
          %s2175 = int_to_ptr.vmem [resolvable:$true] %s2174
          %s2176 = sshll.u32 %s2173, 4
          %s2177 = int_to_ptr.hbm [resolvable:$true] %s2176
          %2182 = dma.vmem_to_hbm [thread:$0]  %s2175, 640, %s2177, %s2160, 128, 128, 8
        $region61: #{tpu_custom_call.1} parent=27 // pred_fallthru
          _
      $region28: #{tpu_custom_call.1} parent=5 // pred_fallthru
        _
      %p2183 = scmp.le.s32.totalorder 2, %s15
      // Predicated region
      $region62: #{tpu_custom_call.1} parent=5 // pred_check
        %p2184 = pneg %p2183
      $region63: #{tpu_custom_call.1} parent=5 // pred_check_branch
        %2186 = sbr.rel (%p2184) target = $region65
      $region64: #{tpu_custom_call.1} parent=5 // pred_region
        %s2187 = ssub.s32 %s15, 2
        // Predicated region
        $region66: #{tpu_custom_call.1} parent=64 // pred_check
          %p2188 = pneg %p105
        $region67: #{tpu_custom_call.1} parent=64 // pred_check_branch
          %2190 = sbr.rel (%p2188) target = $region69
        $region68: #{tpu_custom_call.1} parent=64 // pred_region
          %s2191 = sand.u32 %s90, 1
          %s2192 = scalar_lea.sflag [#allocation5], %s2191
          %s2193 = sand.u32 %s90, 1
          %s2194 = smul.addr %s2193, 40
          %s2195 = scalar_lea.vmem [#allocation8], %s2194
          %2197 = dma.done %s2192, 640
        $region69: #{tpu_custom_call.1} parent=64 // pred_fallthru
          _
      $region65: #{tpu_custom_call.1} parent=5 // pred_fallthru
        _
    $region6: #{tpu_custom_call.1} parent=1 // loop_footer
      %s19 = sadd.s32 1, %s15
    $region7: #{tpu_custom_call.1} parent=1 // loop_footer_branch
      %14 = sbr.rel target = $region3
    $region8: #{tpu_custom_call.1} parent=1 // loop_exit
      _
    %2198 = vsyncpa [#allocation4], 1
    %s2199 = scalar_lea.sflag [#allocation4], 1
    %2200 = vsyncpa %s2199, 1
    %2201 = vsyncpa [#allocation5], 1
    %s2202 = scalar_lea.sflag [#allocation5], 1
    %2203 = vsyncpa %s2202, 1
    %2204 = vsyncpa [#allocation6], 1
    %s2205 = scalar_lea.sflag [#allocation6], 1
    %2206 = vsyncpa %s2205, 1

</llo_original>
